<compile_context>
chip_gen: v6e
topology: v6e:2x2x1
jax: 0.10.0
libtpu: 0.0.40
codegen_flags: <defaults>
</compile_context>

<pallas_src>
import math

import jax
import jax.numpy as jnp
from jax.experimental import pallas as pl
from jax.experimental.pallas import tpu as pltpu


def _sigmoid(v):
    # sigmoid(x) = 0.5 * (tanh(0.5 x) + 1): one EUP op instead of exp + recip.
    return 0.5 * (jnp.tanh(0.5 * v) + 1.0)


# ------------------------------ Fused kernel ----------------------------------
def _make_fused_lstm_kernel(num_layers, T, B, H):
    def kernel(*refs):
        x_ref = refs[0]                                   # (T*B, D_in) time-major
        layer_refs = refs[1:1 + 3 * num_layers]           # per layer: Wih^T, Whh^T, b
        fc_w_ref = refs[1 + 3 * num_layers]               # (H, O)
        fc_b_ref = refs[2 + 3 * num_layers]               # (1, O)
        out_ref = refs[3 + 3 * num_layers]                # (B, O)
        hseq_scr = refs[4 + 3 * num_layers]               # VMEM (T*B, H) inter-layer seq

        h = None
        for l in range(num_layers):
            wih = layer_refs[3 * l][...]                  # (D_l, 4H)
            whh = layer_refs[3 * l + 1][...]              # (H, 4H)
            b = layer_refs[3 * l + 2][...]                # (1, 4H)

            seq = x_ref[...] if l == 0 else hseq_scr[...]  # (T*B, D_l)

            # Hoisted input projection: one MXU matmul over the whole sequence.
            gx = jnp.dot(seq, wih, preferred_element_type=jnp.float32) + b  # (T*B, 4H)

            # Fresh h/c per layer (reset re-keyed to the layer loop).
            h = jnp.zeros((B, H), jnp.float32)
            c = jnp.zeros((B, H), jnp.float32)

            # Serial recurrence: only h @ W_hh^T left per step. T is small and
            # static, so fully unroll (no per-step grid/pipeline overhead).
            for t in range(T):
                gates = gx[t * B:(t + 1) * B, :] + jnp.dot(
                    h, whh, preferred_element_type=jnp.float32)   # (B, 4H)
                i = _sigmoid(gates[:, 0:H])
                f = _sigmoid(gates[:, H:2 * H])
                g = jnp.tanh(gates[:, 2 * H:3 * H])
                o = _sigmoid(gates[:, 3 * H:4 * H])
                c = f * c + i * g
                h = o * jnp.tanh(c)
                if l < num_layers - 1:
                    hseq_scr[pl.ds(t * B, B), :] = h      # feed to next layer (VMEM only)

        # Final Linear fused on the top layer's last-timestep hidden state.
        out = jnp.dot(h, fc_w_ref[...], preferred_element_type=jnp.float32) + fc_b_ref[...]
        out_ref[...] = out.astype(out_ref.dtype)

    return kernel


# ------------------------------ Model wrapper ----------------------------------
def lstm_model_forward(x, params):
    """x: (B, T, input_size) batch_first — same convention as the PyTorch module."""
    B, T, D = x.shape
    H = params["layers"][0][1].shape[0]
    O = params["fc_w_t"].shape[1]
    num_layers = len(params["layers"])

    # Tiny time-major flatten in the wrapper; only x (the smallest tensor) makes
    # an HBM trip — the per-layer (T, B, H) sequences never leave VMEM.
    x_flat = jnp.transpose(x, (1, 0, 2)).reshape(T * B, D)

    flat_weights = []
    for (wih_t, whh_t, bias) in params["layers"]:
        flat_weights += [wih_t, whh_t, bias]

    kernel = _make_fused_lstm_kernel(num_layers, T, B, H)
    return pl.pallas_call(
        kernel,
        out_shape=jax.ShapeDtypeStruct((B, O), x.dtype),
        scratch_shapes=[pltpu.VMEM((T * B, H), jnp.float32)],
    )(x_flat, *flat_weights, params["fc_w_t"], params["fc_b"])


def init_params(key, input_size, hidden_size, num_layers, output_size):
    """Deterministic init mimicking PyTorch's U(-1/sqrt(H), 1/sqrt(H))."""
    stdv = 1.0 / math.sqrt(hidden_size)
    layers = []
    for l in range(num_layers):
        d_in = input_size if l == 0 else hidden_size
        key, k1, k2, k3, k4 = jax.random.split(key, 5)
        w_ih = jax.random.uniform(k1, (4 * hidden_size, d_in), jnp.float32, -stdv, stdv)
        w_hh = jax.random.uniform(k2, (4 * hidden_size, hidden_size), jnp.float32, -stdv, stdv)
        b_ih = jax.random.uniform(k3, (4 * hidden_size,), jnp.float32, -stdv, stdv)
        b_hh = jax.random.uniform(k4, (4 * hidden_size,), jnp.float32, -stdv, stdv)
        layers.append((w_ih.T, w_hh.T, (b_ih + b_hh)[None, :]))
    key, k5, k6 = jax.random.split(key, 3)
    fc_w = jax.random.uniform(k5, (output_size, hidden_size), jnp.float32, -stdv, stdv)
    fc_b = jax.random.uniform(k6, (output_size,), jnp.float32, -stdv, stdv)
    return {"layers": layers, "fc_w_t": fc_w.T, "fc_b": fc_b[None, :]}


# ----------------------------- Pure-JAX reference ------------------------------
def lstm_model_ref(x, params):
    B, T, _ = x.shape
    h_seq = x
    for (wih_t, whh_t, bias) in params["layers"]:
        H = whh_t.shape[0]
        h = jnp.zeros((B, H), jnp.float32)
        c = jnp.zeros((B, H), jnp.float32)
        outs = []
        for t in range(T):
            gates = h_seq[:, t, :] @ wih_t + h @ whh_t + bias
            i = jax.nn.sigmoid(gates[:, :H])
            f = jax.nn.sigmoid(gates[:, H:2 * H])
            g = jnp.tanh(gates[:, 2 * H:3 * H])
            o = jax.nn.sigmoid(gates[:, 3 * H:])
            c = f * c + i * g
            h = o * jnp.tanh(c)
            outs.append(h)
        h_seq = jnp.stack(outs, axis=1)
    return h_seq[:, -1, :] @ params["fc_w_t"] + params["fc_b"]


if __name__ == "__main__":
    # Small shapes consistent with the module's forward:
    B, T = 2, 8
    input_size, hidden_size, num_layers, output_size = 4, 32, 2, 4
    dropout_prob = 0.1  # unused at inference

    key = jax.random.PRNGKey(0)
    key, kx, kp = jax.random.split(key, 3)
    x = jax.random.normal(kx, (B, T, input_size), jnp.float32)
    params = init_params(kp, input_size, hidden_size, num_layers, output_size)

    out = lstm_model_forward(x, params)
    out = jax.block_until_ready(out)

    ref = lstm_model_ref(x, params)
    assert out.shape == (B, output_size), out.shape
    assert jnp.allclose(out, ref, atol=5e-3, rtol=5e-3), (out, ref)

    print("KERNEL_OK")
</pallas_src>

<mosaic_0001>
module attributes {stable_mosaic.version = 11 : i64} {
  func.func @kernel(%arg0: memref<16x4xf32, #tpu.memory_space<vmem>>, %arg1: memref<4x128xf32, #tpu.memory_space<vmem>>, %arg2: memref<32x128xf32, #tpu.memory_space<vmem>>, %arg3: memref<1x128xf32, #tpu.memory_space<vmem>>, %arg4: memref<32x128xf32, #tpu.memory_space<vmem>>, %arg5: memref<32x128xf32, #tpu.memory_space<vmem>>, %arg6: memref<1x128xf32, #tpu.memory_space<vmem>>, %arg7: memref<32x4xf32, #tpu.memory_space<vmem>>, %arg8: memref<1x4xf32, #tpu.memory_space<vmem>>, %arg9: memref<2x4xf32, #tpu.memory_space<vmem>>, %arg10: memref<16x32xf32, #tpu.memory_space<vmem>>) attributes {dimension_semantics = [], scalar_prefetch = 0 : i64, scratch_operands = 1 : i64, tpu.core_type = #tpu.core_type<tc>} {
    %c0 = arith.constant 0 : index
    %c0_0 = arith.constant 0 : index
    %0 = vector.load %arg1[%c0, %c0_0] : memref<4x128xf32, #tpu.memory_space<vmem>>, vector<4x128xf32>
    %c0_1 = arith.constant 0 : index
    %c0_2 = arith.constant 0 : index
    %1 = vector.load %arg2[%c0_1, %c0_2] : memref<32x128xf32, #tpu.memory_space<vmem>>, vector<32x128xf32>
    %c0_3 = arith.constant 0 : index
    %c0_4 = arith.constant 0 : index
    %2 = vector.load %arg3[%c0_3, %c0_4] : memref<1x128xf32, #tpu.memory_space<vmem>>, vector<1x128xf32>
    %c0_5 = arith.constant 0 : index
    %c0_6 = arith.constant 0 : index
    %3 = vector.load %arg0[%c0_5, %c0_6] : memref<16x4xf32, #tpu.memory_space<vmem>>, vector<16x4xf32>
    %cst = arith.constant dense<0.000000e+00> : vector<16x128xf32>
    %4 = tpu.matmul %3, %0, %cst {dimension_numbers = #tpu.dot_dimension_numbers<[1], [0], [0], [1], [0, 0, 1, 1], [], []>} : vector<16x4xf32>, vector<4x128xf32>, vector<16x128xf32> -> vector<16x128xf32>
    %5 = vector.broadcast %2 : vector<1x128xf32> to vector<16x128xf32>
    %6 = arith.addf %4, %5 : vector<16x128xf32>
    %cst_7 = arith.constant 0.000000e+00 : f32
    %7 = vector.broadcast %cst_7 : f32 to vector<2x32xf32>
    %cst_8 = arith.constant 0.000000e+00 : f32
    %8 = vector.broadcast %cst_8 : f32 to vector<2x32xf32>
    %9 = vector.extract_strided_slice %6 {offsets = [0, 0], sizes = [2, 128], strides = [1, 1]} : vector<16x128xf32> to vector<2x128xf32>
    %cst_9 = arith.constant dense<0.000000e+00> : vector<2x128xf32>
    %10 = tpu.matmul %7, %1, %cst_9 {dimension_numbers = #tpu.dot_dimension_numbers<[1], [0], [0], [1], [0, 0, 1, 1], [], []>} : vector<2x32xf32>, vector<32x128xf32>, vector<2x128xf32> -> vector<2x128xf32>
    %11 = arith.addf %9, %10 : vector<2x128xf32>
    %12 = vector.extract_strided_slice %11 {offsets = [0, 0], sizes = [2, 32], strides = [1, 1]} : vector<2x128xf32> to vector<2x32xf32>
    %cst_10 = arith.constant 5.000000e-01 : f32
    %13 = vector.broadcast %cst_10 : f32 to vector<2x32xf32>
    %14 = arith.mulf %13, %12 : vector<2x32xf32>
    %15 = math.tanh %14 : vector<2x32xf32>
    %cst_11 = arith.constant 1.000000e+00 : f32
    %16 = vector.broadcast %cst_11 : f32 to vector<2x32xf32>
    %17 = arith.addf %15, %16 : vector<2x32xf32>
    %cst_12 = arith.constant 5.000000e-01 : f32
    %18 = vector.broadcast %cst_12 : f32 to vector<2x32xf32>
    %19 = arith.mulf %18, %17 : vector<2x32xf32>
    %20 = vector.extract_strided_slice %11 {offsets = [0, 32], sizes = [2, 32], strides = [1, 1]} : vector<2x128xf32> to vector<2x32xf32>
    %cst_13 = arith.constant 5.000000e-01 : f32
    %21 = vector.broadcast %cst_13 : f32 to vector<2x32xf32>
    %22 = arith.mulf %21, %20 : vector<2x32xf32>
    %23 = math.tanh %22 : vector<2x32xf32>
    %cst_14 = arith.constant 1.000000e+00 : f32
    %24 = vector.broadcast %cst_14 : f32 to vector<2x32xf32>
    %25 = arith.addf %23, %24 : vector<2x32xf32>
    %cst_15 = arith.constant 5.000000e-01 : f32
    %26 = vector.broadcast %cst_15 : f32 to vector<2x32xf32>
    %27 = arith.mulf %26, %25 : vector<2x32xf32>
    %28 = vector.extract_strided_slice %11 {offsets = [0, 64], sizes = [2, 32], strides = [1, 1]} : vector<2x128xf32> to vector<2x32xf32>
    %29 = math.tanh %28 : vector<2x32xf32>
    %30 = vector.extract_strided_slice %11 {offsets = [0, 96], sizes = [2, 32], strides = [1, 1]} : vector<2x128xf32> to vector<2x32xf32>
    %cst_16 = arith.constant 5.000000e-01 : f32
    %31 = vector.broadcast %cst_16 : f32 to vector<2x32xf32>
    %32 = arith.mulf %31, %30 : vector<2x32xf32>
    %33 = math.tanh %32 : vector<2x32xf32>
    %cst_17 = arith.constant 1.000000e+00 : f32
    %34 = vector.broadcast %cst_17 : f32 to vector<2x32xf32>
    %35 = arith.addf %33, %34 : vector<2x32xf32>
    %cst_18 = arith.constant 5.000000e-01 : f32
    %36 = vector.broadcast %cst_18 : f32 to vector<2x32xf32>
    %37 = arith.mulf %36, %35 : vector<2x32xf32>
    %38 = arith.mulf %27, %8 : vector<2x32xf32>
    %39 = arith.mulf %19, %29 : vector<2x32xf32>
    %40 = arith.addf %38, %39 : vector<2x32xf32>
    %41 = math.tanh %40 : vector<2x32xf32>
    %42 = arith.mulf %37, %41 : vector<2x32xf32>
    %c0_19 = arith.constant 0 : index
    %c0_20 = arith.constant 0 : index
    %43 = vector.load %arg10[%c0_19, %c0_20] : memref<16x32xf32, #tpu.memory_space<vmem>>, vector<2x32xf32>
    tpu.vector_store %arg10[%c0_19, %c0_20], %42 {strides = array<i32>} : memref<16x32xf32, #tpu.memory_space<vmem>>, vector<2x32xf32>,
    %44 = vector.extract_strided_slice %6 {offsets = [2, 0], sizes = [2, 128], strides = [1, 1]} : vector<16x128xf32> to vector<2x128xf32>
    %cst_21 = arith.constant dense<0.000000e+00> : vector<2x128xf32>
    %45 = tpu.matmul %42, %1, %cst_21 {dimension_numbers = #tpu.dot_dimension_numbers<[1], [0], [0], [1], [0, 0, 1, 1], [], []>} : vector<2x32xf32>, vector<32x128xf32>, vector<2x128xf32> -> vector<2x128xf32>
    %46 = arith.addf %44, %45 : vector<2x128xf32>
    %47 = vector.extract_strided_slice %46 {offsets = [0, 0], sizes = [2, 32], strides = [1, 1]} : vector<2x128xf32> to vector<2x32xf32>
    %cst_22 = arith.constant 5.000000e-01 : f32
    %48 = vector.broadcast %cst_22 : f32 to vector<2x32xf32>
    %49 = arith.mulf %48, %47 : vector<2x32xf32>
    %50 = math.tanh %49 : vector<2x32xf32>
    %cst_23 = arith.constant 1.000000e+00 : f32
    %51 = vector.broadcast %cst_23 : f32 to vector<2x32xf32>
    %52 = arith.addf %50, %51 : vector<2x32xf32>
    %cst_24 = arith.constant 5.000000e-01 : f32
    %53 = vector.broadcast %cst_24 : f32 to vector<2x32xf32>
    %54 = arith.mulf %53, %52 : vector<2x32xf32>
    %55 = vector.extract_strided_slice %46 {offsets = [0, 32], sizes = [2, 32], strides = [1, 1]} : vector<2x128xf32> to vector<2x32xf32>
    %cst_25 = arith.constant 5.000000e-01 : f32
    %56 = vector.broadcast %cst_25 : f32 to vector<2x32xf32>
    %57 = arith.mulf %56, %55 : vector<2x32xf32>
    %58 = math.tanh %57 : vector<2x32xf32>
    %cst_26 = arith.constant 1.000000e+00 : f32
    %59 = vector.broadcast %cst_26 : f32 to vector<2x32xf32>
    %60 = arith.addf %58, %59 : vector<2x32xf32>
    %cst_27 = arith.constant 5.000000e-01 : f32
    %61 = vector.broadcast %cst_27 : f32 to vector<2x32xf32>
    %62 = arith.mulf %61, %60 : vector<2x32xf32>
    %63 = vector.extract_strided_slice %46 {offsets = [0, 64], sizes = [2, 32], strides = [1, 1]} : vector<2x128xf32> to vector<2x32xf32>
    %64 = math.tanh %63 : vector<2x32xf32>
    %65 = vector.extract_strided_slice %46 {offsets = [0, 96], sizes = [2, 32], strides = [1, 1]} : vector<2x128xf32> to vector<2x32xf32>
    %cst_28 = arith.constant 5.000000e-01 : f32
    %66 = vector.broadcast %cst_28 : f32 to vector<2x32xf32>
    %67 = arith.mulf %66, %65 : vector<2x32xf32>
    %68 = math.tanh %67 : vector<2x32xf32>
    %cst_29 = arith.constant 1.000000e+00 : f32
    %69 = vector.broadcast %cst_29 : f32 to vector<2x32xf32>
    %70 = arith.addf %68, %69 : vector<2x32xf32>
    %cst_30 = arith.constant 5.000000e-01 : f32
    %71 = vector.broadcast %cst_30 : f32 to vector<2x32xf32>
    %72 = arith.mulf %71, %70 : vector<2x32xf32>
    %73 = arith.mulf %62, %40 : vector<2x32xf32>
    %74 = arith.mulf %54, %64 : vector<2x32xf32>
    %75 = arith.addf %73, %74 : vector<2x32xf32>
    %76 = math.tanh %75 : vector<2x32xf32>
    %77 = arith.mulf %72, %76 : vector<2x32xf32>
    %c2 = arith.constant 2 : index
    %c0_31 = arith.constant 0 : index
    %78 = vector.load %arg10[%c2, %c0_31] : memref<16x32xf32, #tpu.memory_space<vmem>>, vector<2x32xf32>
    tpu.vector_store %arg10[%c2, %c0_31], %77 {strides = array<i32>} : memref<16x32xf32, #tpu.memory_space<vmem>>, vector<2x32xf32>,
    %79 = vector.extract_strided_slice %6 {offsets = [4, 0], sizes = [2, 128], strides = [1, 1]} : vector<16x128xf32> to vector<2x128xf32>
    %cst_32 = arith.constant dense<0.000000e+00> : vector<2x128xf32>
    %80 = tpu.matmul %77, %1, %cst_32 {dimension_numbers = #tpu.dot_dimension_numbers<[1], [0], [0], [1], [0, 0, 1, 1], [], []>} : vector<2x32xf32>, vector<32x128xf32>, vector<2x128xf32> -> vector<2x128xf32>
    %81 = arith.addf %79, %80 : vector<2x128xf32>
    %82 = vector.extract_strided_slice %81 {offsets = [0, 0], sizes = [2, 32], strides = [1, 1]} : vector<2x128xf32> to vector<2x32xf32>
    %cst_33 = arith.constant 5.000000e-01 : f32
    %83 = vector.broadcast %cst_33 : f32 to vector<2x32xf32>
    %84 = arith.mulf %83, %82 : vector<2x32xf32>
    %85 = math.tanh %84 : vector<2x32xf32>
    %cst_34 = arith.constant 1.000000e+00 : f32
    %86 = vector.broadcast %cst_34 : f32 to vector<2x32xf32>
    %87 = arith.addf %85, %86 : vector<2x32xf32>
    %cst_35 = arith.constant 5.000000e-01 : f32
    %88 = vector.broadcast %cst_35 : f32 to vector<2x32xf32>
    %89 = arith.mulf %88, %87 : vector<2x32xf32>
    %90 = vector.extract_strided_slice %81 {offsets = [0, 32], sizes = [2, 32], strides = [1, 1]} : vector<2x128xf32> to vector<2x32xf32>
    %cst_36 = arith.constant 5.000000e-01 : f32
    %91 = vector.broadcast %cst_36 : f32 to vector<2x32xf32>
    %92 = arith.mulf %91, %90 : vector<2x32xf32>
    %93 = math.tanh %92 : vector<2x32xf32>
    %cst_37 = arith.constant 1.000000e+00 : f32
    %94 = vector.broadcast %cst_37 : f32 to vector<2x32xf32>
    %95 = arith.addf %93, %94 : vector<2x32xf32>
    %cst_38 = arith.constant 5.000000e-01 : f32
    %96 = vector.broadcast %cst_38 : f32 to vector<2x32xf32>
    %97 = arith.mulf %96, %95 : vector<2x32xf32>
    %98 = vector.extract_strided_slice %81 {offsets = [0, 64], sizes = [2, 32], strides = [1, 1]} : vector<2x128xf32> to vector<2x32xf32>
    %99 = math.tanh %98 : vector<2x32xf32>
    %100 = vector.extract_strided_slice %81 {offsets = [0, 96], sizes = [2, 32], strides = [1, 1]} : vector<2x128xf32> to vector<2x32xf32>
    %cst_39 = arith.constant 5.000000e-01 : f32
    %101 = vector.broadcast %cst_39 : f32 to vector<2x32xf32>
    %102 = arith.mulf %101, %100 : vector<2x32xf32>
    %103 = math.tanh %102 : vector<2x32xf32>
    %cst_40 = arith.constant 1.000000e+00 : f32
    %104 = vector.broadcast %cst_40 : f32 to vector<2x32xf32>
    %105 = arith.addf %103, %104 : vector<2x32xf32>
    %cst_41 = arith.constant 5.000000e-01 : f32
    %106 = vector.broadcast %cst_41 : f32 to vector<2x32xf32>
    %107 = arith.mulf %106, %105 : vector<2x32xf32>
    %108 = arith.mulf %97, %75 : vector<2x32xf32>
    %109 = arith.mulf %89, %99 : vector<2x32xf32>
    %110 = arith.addf %108, %109 : vector<2x32xf32>
    %111 = math.tanh %110 : vector<2x32xf32>
    %112 = arith.mulf %107, %111 : vector<2x32xf32>
    %c4 = arith.constant 4 : index
    %c0_42 = arith.constant 0 : index
    %113 = vector.load %arg10[%c4, %c0_42] : memref<16x32xf32, #tpu.memory_space<vmem>>, vector<2x32xf32>
    tpu.vector_store %arg10[%c4, %c0_42], %112 {strides = array<i32>} : memref<16x32xf32, #tpu.memory_space<vmem>>, vector<2x32xf32>,
    %114 = vector.extract_strided_slice %6 {offsets = [6, 0], sizes = [2, 128], strides = [1, 1]} : vector<16x128xf32> to vector<2x128xf32>
    %cst_43 = arith.constant dense<0.000000e+00> : vector<2x128xf32>
    %115 = tpu.matmul %112, %1, %cst_43 {dimension_numbers = #tpu.dot_dimension_numbers<[1], [0], [0], [1], [0, 0, 1, 1], [], []>} : vector<2x32xf32>, vector<32x128xf32>, vector<2x128xf32> -> vector<2x128xf32>
    %116 = arith.addf %114, %115 : vector<2x128xf32>
    %117 = vector.extract_strided_slice %116 {offsets = [0, 0], sizes = [2, 32], strides = [1, 1]} : vector<2x128xf32> to vector<2x32xf32>
    %cst_44 = arith.constant 5.000000e-01 : f32
    %118 = vector.broadcast %cst_44 : f32 to vector<2x32xf32>
    %119 = arith.mulf %118, %117 : vector<2x32xf32>
    %120 = math.tanh %119 : vector<2x32xf32>
    %cst_45 = arith.constant 1.000000e+00 : f32
    %121 = vector.broadcast %cst_45 : f32 to vector<2x32xf32>
    %122 = arith.addf %120, %121 : vector<2x32xf32>
    %cst_46 = arith.constant 5.000000e-01 : f32
    %123 = vector.broadcast %cst_46 : f32 to vector<2x32xf32>
    %124 = arith.mulf %123, %122 : vector<2x32xf32>
    %125 = vector.extract_strided_slice %116 {offsets = [0, 32], sizes = [2, 32], strides = [1, 1]} : vector<2x128xf32> to vector<2x32xf32>
    %cst_47 = arith.constant 5.000000e-01 : f32
    %126 = vector.broadcast %cst_47 : f32 to vector<2x32xf32>
    %127 = arith.mulf %126, %125 : vector<2x32xf32>
    %128 = math.tanh %127 : vector<2x32xf32>
    %cst_48 = arith.constant 1.000000e+00 : f32
    %129 = vector.broadcast %cst_48 : f32 to vector<2x32xf32>
    %130 = arith.addf %128, %129 : vector<2x32xf32>
    %cst_49 = arith.constant 5.000000e-01 : f32
    %131 = vector.broadcast %cst_49 : f32 to vector<2x32xf32>
    %132 = arith.mulf %131, %130 : vector<2x32xf32>
    %133 = vector.extract_strided_slice %116 {offsets = [0, 64], sizes = [2, 32], strides = [1, 1]} : vector<2x128xf32> to vector<2x32xf32>
    %134 = math.tanh %133 : vector<2x32xf32>
    %135 = vector.extract_strided_slice %116 {offsets = [0, 96], sizes = [2, 32], strides = [1, 1]} : vector<2x128xf32> to vector<2x32xf32>
    %cst_50 = arith.constant 5.000000e-01 : f32
    %136 = vector.broadcast %cst_50 : f32 to vector<2x32xf32>
    %137 = arith.mulf %136, %135 : vector<2x32xf32>
    %138 = math.tanh %137 : vector<2x32xf32>
    %cst_51 = arith.constant 1.000000e+00 : f32
    %139 = vector.broadcast %cst_51 : f32 to vector<2x32xf32>
    %140 = arith.addf %138, %139 : vector<2x32xf32>
    %cst_52 = arith.constant 5.000000e-01 : f32
    %141 = vector.broadcast %cst_52 : f32 to vector<2x32xf32>
    %142 = arith.mulf %141, %140 : vector<2x32xf32>
    %143 = arith.mulf %132, %110 : vector<2x32xf32>
    %144 = arith.mulf %124, %134 : vector<2x32xf32>
    %145 = arith.addf %143, %144 : vector<2x32xf32>
    %146 = math.tanh %145 : vector<2x32xf32>
    %147 = arith.mulf %142, %146 : vector<2x32xf32>
    %c6 = arith.constant 6 : index
    %c0_53 = arith.constant 0 : index
    %148 = vector.load %arg10[%c6, %c0_53] : memref<16x32xf32, #tpu.memory_space<vmem>>, vector<2x32xf32>
    tpu.vector_store %arg10[%c6, %c0_53], %147 {strides = array<i32>} : memref<16x32xf32, #tpu.memory_space<vmem>>, vector<2x32xf32>,
    %149 = vector.extract_strided_slice %6 {offsets = [8, 0], sizes = [2, 128], strides = [1, 1]} : vector<16x128xf32> to vector<2x128xf32>
    %cst_54 = arith.constant dense<0.000000e+00> : vector<2x128xf32>
    %150 = tpu.matmul %147, %1, %cst_54 {dimension_numbers = #tpu.dot_dimension_numbers<[1], [0], [0], [1], [0, 0, 1, 1], [], []>} : vector<2x32xf32>, vector<32x128xf32>, vector<2x128xf32> -> vector<2x128xf32>
    %151 = arith.addf %149, %150 : vector<2x128xf32>
    %152 = vector.extract_strided_slice %151 {offsets = [0, 0], sizes = [2, 32], strides = [1, 1]} : vector<2x128xf32> to vector<2x32xf32>
    %cst_55 = arith.constant 5.000000e-01 : f32
    %153 = vector.broadcast %cst_55 : f32 to vector<2x32xf32>
    %154 = arith.mulf %153, %152 : vector<2x32xf32>
    %155 = math.tanh %154 : vector<2x32xf32>
    %cst_56 = arith.constant 1.000000e+00 : f32
    %156 = vector.broadcast %cst_56 : f32 to vector<2x32xf32>
    %157 = arith.addf %155, %156 : vector<2x32xf32>
    %cst_57 = arith.constant 5.000000e-01 : f32
    %158 = vector.broadcast %cst_57 : f32 to vector<2x32xf32>
    %159 = arith.mulf %158, %157 : vector<2x32xf32>
    %160 = vector.extract_strided_slice %151 {offsets = [0, 32], sizes = [2, 32], strides = [1, 1]} : vector<2x128xf32> to vector<2x32xf32>
    %cst_58 = arith.constant 5.000000e-01 : f32
    %161 = vector.broadcast %cst_58 : f32 to vector<2x32xf32>
    %162 = arith.mulf %161, %160 : vector<2x32xf32>
    %163 = math.tanh %162 : vector<2x32xf32>
    %cst_59 = arith.constant 1.000000e+00 : f32
    %164 = vector.broadcast %cst_59 : f32 to vector<2x32xf32>
    %165 = arith.addf %163, %164 : vector<2x32xf32>
    %cst_60 = arith.constant 5.000000e-01 : f32
    %166 = vector.broadcast %cst_60 : f32 to vector<2x32xf32>
    %167 = arith.mulf %166, %165 : vector<2x32xf32>
    %168 = vector.extract_strided_slice %151 {offsets = [0, 64], sizes = [2, 32], strides = [1, 1]} : vector<2x128xf32> to vector<2x32xf32>
    %169 = math.tanh %168 : vector<2x32xf32>
    %170 = vector.extract_strided_slice %151 {offsets = [0, 96], sizes = [2, 32], strides = [1, 1]} : vector<2x128xf32> to vector<2x32xf32>
    %cst_61 = arith.constant 5.000000e-01 : f32
    %171 = vector.broadcast %cst_61 : f32 to vector<2x32xf32>
    %172 = arith.mulf %171, %170 : vector<2x32xf32>
    %173 = math.tanh %172 : vector<2x32xf32>
    %cst_62 = arith.constant 1.000000e+00 : f32
    %174 = vector.broadcast %cst_62 : f32 to vector<2x32xf32>
    %175 = arith.addf %173, %174 : vector<2x32xf32>
    %cst_63 = arith.constant 5.000000e-01 : f32
    %176 = vector.broadcast %cst_63 : f32 to vector<2x32xf32>
    %177 = arith.mulf %176, %175 : vector<2x32xf32>
    %178 = arith.mulf %167, %145 : vector<2x32xf32>
    %179 = arith.mulf %159, %169 : vector<2x32xf32>
    %180 = arith.addf %178, %179 : vector<2x32xf32>
    %181 = math.tanh %180 : vector<2x32xf32>
    %182 = arith.mulf %177, %181 : vector<2x32xf32>
    %c8 = arith.constant 8 : index
    %c0_64 = arith.constant 0 : index
    %183 = vector.load %arg10[%c8, %c0_64] : memref<16x32xf32, #tpu.memory_space<vmem>>, vector<2x32xf32>
    tpu.vector_store %arg10[%c8, %c0_64], %182 {strides = array<i32>} : memref<16x32xf32, #tpu.memory_space<vmem>>, vector<2x32xf32>,
    %184 = vector.extract_strided_slice %6 {offsets = [10, 0], sizes = [2, 128], strides = [1, 1]} : vector<16x128xf32> to vector<2x128xf32>
    %cst_65 = arith.constant dense<0.000000e+00> : vector<2x128xf32>
    %185 = tpu.matmul %182, %1, %cst_65 {dimension_numbers = #tpu.dot_dimension_numbers<[1], [0], [0], [1], [0, 0, 1, 1], [], []>} : vector<2x32xf32>, vector<32x128xf32>, vector<2x128xf32> -> vector<2x128xf32>
    %186 = arith.addf %184, %185 : vector<2x128xf32>
    %187 = vector.extract_strided_slice %186 {offsets = [0, 0], sizes = [2, 32], strides = [1, 1]} : vector<2x128xf32> to vector<2x32xf32>
    %cst_66 = arith.constant 5.000000e-01 : f32
    %188 = vector.broadcast %cst_66 : f32 to vector<2x32xf32>
    %189 = arith.mulf %188, %187 : vector<2x32xf32>
    %190 = math.tanh %189 : vector<2x32xf32>
    %cst_67 = arith.constant 1.000000e+00 : f32
    %191 = vector.broadcast %cst_67 : f32 to vector<2x32xf32>
    %192 = arith.addf %190, %191 : vector<2x32xf32>
    %cst_68 = arith.constant 5.000000e-01 : f32
    %193 = vector.broadcast %cst_68 : f32 to vector<2x32xf32>
    %194 = arith.mulf %193, %192 : vector<2x32xf32>
    %195 = vector.extract_strided_slice %186 {offsets = [0, 32], sizes = [2, 32], strides = [1, 1]} : vector<2x128xf32> to vector<2x32xf32>
    %cst_69 = arith.constant 5.000000e-01 : f32
    %196 = vector.broadcast %cst_69 : f32 to vector<2x32xf32>
    %197 = arith.mulf %196, %195 : vector<2x32xf32>
    %198 = math.tanh %197 : vector<2x32xf32>
    %cst_70 = arith.constant 1.000000e+00 : f32
    %199 = vector.broadcast %cst_70 : f32 to vector<2x32xf32>
    %200 = arith.addf %198, %199 : vector<2x32xf32>
    %cst_71 = arith.constant 5.000000e-01 : f32
    %201 = vector.broadcast %cst_71 : f32 to vector<2x32xf32>
    %202 = arith.mulf %201, %200 : vector<2x32xf32>
    %203 = vector.extract_strided_slice %186 {offsets = [0, 64], sizes = [2, 32], strides = [1, 1]} : vector<2x128xf32> to vector<2x32xf32>
    %204 = math.tanh %203 : vector<2x32xf32>
    %205 = vector.extract_strided_slice %186 {offsets = [0, 96], sizes = [2, 32], strides = [1, 1]} : vector<2x128xf32> to vector<2x32xf32>
    %cst_72 = arith.constant 5.000000e-01 : f32
    %206 = vector.broadcast %cst_72 : f32 to vector<2x32xf32>
    %207 = arith.mulf %206, %205 : vector<2x32xf32>
    %208 = math.tanh %207 : vector<2x32xf32>
    %cst_73 = arith.constant 1.000000e+00 : f32
    %209 = vector.broadcast %cst_73 : f32 to vector<2x32xf32>
    %210 = arith.addf %208, %209 : vector<2x32xf32>
    %cst_74 = arith.constant 5.000000e-01 : f32
    %211 = vector.broadcast %cst_74 : f32 to vector<2x32xf32>
    %212 = arith.mulf %211, %210 : vector<2x32xf32>
    %213 = arith.mulf %202, %180 : vector<2x32xf32>
    %214 = arith.mulf %194, %204 : vector<2x32xf32>
    %215 = arith.addf %213, %214 : vector<2x32xf32>
    %216 = math.tanh %215 : vector<2x32xf32>
    %217 = arith.mulf %212, %216 : vector<2x32xf32>
    %c10 = arith.constant 10 : index
    %c0_75 = arith.constant 0 : index
    %218 = vector.load %arg10[%c10, %c0_75] : memref<16x32xf32, #tpu.memory_space<vmem>>, vector<2x32xf32>
    tpu.vector_store %arg10[%c10, %c0_75], %217 {strides = array<i32>} : memref<16x32xf32, #tpu.memory_space<vmem>>, vector<2x32xf32>,
    %219 = vector.extract_strided_slice %6 {offsets = [12, 0], sizes = [2, 128], strides = [1, 1]} : vector<16x128xf32> to vector<2x128xf32>
    %cst_76 = arith.constant dense<0.000000e+00> : vector<2x128xf32>
    %220 = tpu.matmul %217, %1, %cst_76 {dimension_numbers = #tpu.dot_dimension_numbers<[1], [0], [0], [1], [0, 0, 1, 1], [], []>} : vector<2x32xf32>, vector<32x128xf32>, vector<2x128xf32> -> vector<2x128xf32>
    %221 = arith.addf %219, %220 : vector<2x128xf32>
    %222 = vector.extract_strided_slice %221 {offsets = [0, 0], sizes = [2, 32], strides = [1, 1]} : vector<2x128xf32> to vector<2x32xf32>
    %cst_77 = arith.constant 5.000000e-01 : f32
    %223 = vector.broadcast %cst_77 : f32 to vector<2x32xf32>
    %224 = arith.mulf %223, %222 : vector<2x32xf32>
    %225 = math.tanh %224 : vector<2x32xf32>
    %cst_78 = arith.constant 1.000000e+00 : f32
    %226 = vector.broadcast %cst_78 : f32 to vector<2x32xf32>
    %227 = arith.addf %225, %226 : vector<2x32xf32>
    %cst_79 = arith.constant 5.000000e-01 : f32
    %228 = vector.broadcast %cst_79 : f32 to vector<2x32xf32>
    %229 = arith.mulf %228, %227 : vector<2x32xf32>
    %230 = vector.extract_strided_slice %221 {offsets = [0, 32], sizes = [2, 32], strides = [1, 1]} : vector<2x128xf32> to vector<2x32xf32>
    %cst_80 = arith.constant 5.000000e-01 : f32
    %231 = vector.broadcast %cst_80 : f32 to vector<2x32xf32>
    %232 = arith.mulf %231, %230 : vector<2x32xf32>
    %233 = math.tanh %232 : vector<2x32xf32>
    %cst_81 = arith.constant 1.000000e+00 : f32
    %234 = vector.broadcast %cst_81 : f32 to vector<2x32xf32>
    %235 = arith.addf %233, %234 : vector<2x32xf32>
    %cst_82 = arith.constant 5.000000e-01 : f32
    %236 = vector.broadcast %cst_82 : f32 to vector<2x32xf32>
    %237 = arith.mulf %236, %235 : vector<2x32xf32>
    %238 = vector.extract_strided_slice %221 {offsets = [0, 64], sizes = [2, 32], strides = [1, 1]} : vector<2x128xf32> to vector<2x32xf32>
    %239 = math.tanh %238 : vector<2x32xf32>
    %240 = vector.extract_strided_slice %221 {offsets = [0, 96], sizes = [2, 32], strides = [1, 1]} : vector<2x128xf32> to vector<2x32xf32>
    %cst_83 = arith.constant 5.000000e-01 : f32
    %241 = vector.broadcast %cst_83 : f32 to vector<2x32xf32>
    %242 = arith.mulf %241, %240 : vector<2x32xf32>
    %243 = math.tanh %242 : vector<2x32xf32>
    %cst_84 = arith.constant 1.000000e+00 : f32
    %244 = vector.broadcast %cst_84 : f32 to vector<2x32xf32>
    %245 = arith.addf %243, %244 : vector<2x32xf32>
    %cst_85 = arith.constant 5.000000e-01 : f32
    %246 = vector.broadcast %cst_85 : f32 to vector<2x32xf32>
    %247 = arith.mulf %246, %245 : vector<2x32xf32>
    %248 = arith.mulf %237, %215 : vector<2x32xf32>
    %249 = arith.mulf %229, %239 : vector<2x32xf32>
    %250 = arith.addf %248, %249 : vector<2x32xf32>
    %251 = math.tanh %250 : vector<2x32xf32>
    %252 = arith.mulf %247, %251 : vector<2x32xf32>
    %c12 = arith.constant 12 : index
    %c0_86 = arith.constant 0 : index
    %253 = vector.load %arg10[%c12, %c0_86] : memref<16x32xf32, #tpu.memory_space<vmem>>, vector<2x32xf32>
    tpu.vector_store %arg10[%c12, %c0_86], %252 {strides = array<i32>} : memref<16x32xf32, #tpu.memory_space<vmem>>, vector<2x32xf32>,
    %254 = vector.extract_strided_slice %6 {offsets = [14, 0], sizes = [2, 128], strides = [1, 1]} : vector<16x128xf32> to vector<2x128xf32>
    %cst_87 = arith.constant dense<0.000000e+00> : vector<2x128xf32>
    %255 = tpu.matmul %252, %1, %cst_87 {dimension_numbers = #tpu.dot_dimension_numbers<[1], [0], [0], [1], [0, 0, 1, 1], [], []>} : vector<2x32xf32>, vector<32x128xf32>, vector<2x128xf32> -> vector<2x128xf32>
    %256 = arith.addf %254, %255 : vector<2x128xf32>
    %257 = vector.extract_strided_slice %256 {offsets = [0, 0], sizes = [2, 32], strides = [1, 1]} : vector<2x128xf32> to vector<2x32xf32>
    %cst_88 = arith.constant 5.000000e-01 : f32
    %258 = vector.broadcast %cst_88 : f32 to vector<2x32xf32>
    %259 = arith.mulf %258, %257 : vector<2x32xf32>
    %260 = math.tanh %259 : vector<2x32xf32>
    %cst_89 = arith.constant 1.000000e+00 : f32
    %261 = vector.broadcast %cst_89 : f32 to vector<2x32xf32>
    %262 = arith.addf %260, %261 : vector<2x32xf32>
    %cst_90 = arith.constant 5.000000e-01 : f32
    %263 = vector.broadcast %cst_90 : f32 to vector<2x32xf32>
    %264 = arith.mulf %263, %262 : vector<2x32xf32>
    %265 = vector.extract_strided_slice %256 {offsets = [0, 32], sizes = [2, 32], strides = [1, 1]} : vector<2x128xf32> to vector<2x32xf32>
    %cst_91 = arith.constant 5.000000e-01 : f32
    %266 = vector.broadcast %cst_91 : f32 to vector<2x32xf32>
    %267 = arith.mulf %266, %265 : vector<2x32xf32>
    %268 = math.tanh %267 : vector<2x32xf32>
    %cst_92 = arith.constant 1.000000e+00 : f32
    %269 = vector.broadcast %cst_92 : f32 to vector<2x32xf32>
    %270 = arith.addf %268, %269 : vector<2x32xf32>
    %cst_93 = arith.constant 5.000000e-01 : f32
    %271 = vector.broadcast %cst_93 : f32 to vector<2x32xf32>
    %272 = arith.mulf %271, %270 : vector<2x32xf32>
    %273 = vector.extract_strided_slice %256 {offsets = [0, 64], sizes = [2, 32], strides = [1, 1]} : vector<2x128xf32> to vector<2x32xf32>
    %274 = math.tanh %273 : vector<2x32xf32>
    %275 = vector.extract_strided_slice %256 {offsets = [0, 96], sizes = [2, 32], strides = [1, 1]} : vector<2x128xf32> to vector<2x32xf32>
    %cst_94 = arith.constant 5.000000e-01 : f32
    %276 = vector.broadcast %cst_94 : f32 to vector<2x32xf32>
    %277 = arith.mulf %276, %275 : vector<2x32xf32>
    %278 = math.tanh %277 : vector<2x32xf32>
    %cst_95 = arith.constant 1.000000e+00 : f32
    %279 = vector.broadcast %cst_95 : f32 to vector<2x32xf32>
    %280 = arith.addf %278, %279 : vector<2x32xf32>
    %cst_96 = arith.constant 5.000000e-01 : f32
    %281 = vector.broadcast %cst_96 : f32 to vector<2x32xf32>
    %282 = arith.mulf %281, %280 : vector<2x32xf32>
    %283 = arith.mulf %272, %250 : vector<2x32xf32>
    %284 = arith.mulf %264, %274 : vector<2x32xf32>
    %285 = arith.addf %283, %284 : vector<2x32xf32>
    %286 = math.tanh %285 : vector<2x32xf32>
    %287 = arith.mulf %282, %286 : vector<2x32xf32>
    %c14 = arith.constant 14 : index
    %c0_97 = arith.constant 0 : index
    %288 = vector.load %arg10[%c14, %c0_97] : memref<16x32xf32, #tpu.memory_space<vmem>>, vector<2x32xf32>
    tpu.vector_store %arg10[%c14, %c0_97], %287 {strides = array<i32>} : memref<16x32xf32, #tpu.memory_space<vmem>>, vector<2x32xf32>,
    %c0_98 = arith.constant 0 : index
    %c0_99 = arith.constant 0 : index
    %289 = vector.load %arg4[%c0_98, %c0_99] : memref<32x128xf32, #tpu.memory_space<vmem>>, vector<32x128xf32>
    %c0_100 = arith.constant 0 : index
    %c0_101 = arith.constant 0 : index
    %290 = vector.load %arg5[%c0_100, %c0_101] : memref<32x128xf32, #tpu.memory_space<vmem>>, vector<32x128xf32>
    %c0_102 = arith.constant 0 : index
    %c0_103 = arith.constant 0 : index
    %291 = vector.load %arg6[%c0_102, %c0_103] : memref<1x128xf32, #tpu.memory_space<vmem>>, vector<1x128xf32>
    %c0_104 = arith.constant 0 : index
    %c0_105 = arith.constant 0 : index
    %292 = vector.load %arg10[%c0_104, %c0_105] : memref<16x32xf32, #tpu.memory_space<vmem>>, vector<16x32xf32>
    %cst_106 = arith.constant dense<0.000000e+00> : vector<16x128xf32>
    %293 = tpu.matmul %292, %289, %cst_106 {dimension_numbers = #tpu.dot_dimension_numbers<[1], [0], [0], [1], [0, 0, 1, 1], [], []>} : vector<16x32xf32>, vector<32x128xf32>, vector<16x128xf32> -> vector<16x128xf32>
    %294 = vector.broadcast %291 : vector<1x128xf32> to vector<16x128xf32>
    %295 = arith.addf %293, %294 : vector<16x128xf32>
    %cst_107 = arith.constant 0.000000e+00 : f32
    %296 = vector.broadcast %cst_107 : f32 to vector<2x32xf32>
    %cst_108 = arith.constant 0.000000e+00 : f32
    %297 = vector.broadcast %cst_108 : f32 to vector<2x32xf32>
    %298 = vector.extract_strided_slice %295 {offsets = [0, 0], sizes = [2, 128], strides = [1, 1]} : vector<16x128xf32> to vector<2x128xf32>
    %cst_109 = arith.constant dense<0.000000e+00> : vector<2x128xf32>
    %299 = tpu.matmul %296, %290, %cst_109 {dimension_numbers = #tpu.dot_dimension_numbers<[1], [0], [0], [1], [0, 0, 1, 1], [], []>} : vector<2x32xf32>, vector<32x128xf32>, vector<2x128xf32> -> vector<2x128xf32>
    %300 = arith.addf %298, %299 : vector<2x128xf32>
    %301 = vector.extract_strided_slice %300 {offsets = [0, 0], sizes = [2, 32], strides = [1, 1]} : vector<2x128xf32> to vector<2x32xf32>
    %cst_110 = arith.constant 5.000000e-01 : f32
    %302 = vector.broadcast %cst_110 : f32 to vector<2x32xf32>
    %303 = arith.mulf %302, %301 : vector<2x32xf32>
    %304 = math.tanh %303 : vector<2x32xf32>
    %cst_111 = arith.constant 1.000000e+00 : f32
    %305 = vector.broadcast %cst_111 : f32 to vector<2x32xf32>
    %306 = arith.addf %304, %305 : vector<2x32xf32>
    %cst_112 = arith.constant 5.000000e-01 : f32
    %307 = vector.broadcast %cst_112 : f32 to vector<2x32xf32>
    %308 = arith.mulf %307, %306 : vector<2x32xf32>
    %309 = vector.extract_strided_slice %300 {offsets = [0, 32], sizes = [2, 32], strides = [1, 1]} : vector<2x128xf32> to vector<2x32xf32>
    %cst_113 = arith.constant 5.000000e-01 : f32
    %310 = vector.broadcast %cst_113 : f32 to vector<2x32xf32>
    %311 = arith.mulf %310, %309 : vector<2x32xf32>
    %312 = math.tanh %311 : vector<2x32xf32>
    %cst_114 = arith.constant 1.000000e+00 : f32
    %313 = vector.broadcast %cst_114 : f32 to vector<2x32xf32>
    %314 = arith.addf %312, %313 : vector<2x32xf32>
    %cst_115 = arith.constant 5.000000e-01 : f32
    %315 = vector.broadcast %cst_115 : f32 to vector<2x32xf32>
    %316 = arith.mulf %315, %314 : vector<2x32xf32>
    %317 = vector.extract_strided_slice %300 {offsets = [0, 64], sizes = [2, 32], strides = [1, 1]} : vector<2x128xf32> to vector<2x32xf32>
    %318 = math.tanh %317 : vector<2x32xf32>
    %319 = vector.extract_strided_slice %300 {offsets = [0, 96], sizes = [2, 32], strides = [1, 1]} : vector<2x128xf32> to vector<2x32xf32>
    %cst_116 = arith.constant 5.000000e-01 : f32
    %320 = vector.broadcast %cst_116 : f32 to vector<2x32xf32>
    %321 = arith.mulf %320, %319 : vector<2x32xf32>
    %322 = math.tanh %321 : vector<2x32xf32>
    %cst_117 = arith.constant 1.000000e+00 : f32
    %323 = vector.broadcast %cst_117 : f32 to vector<2x32xf32>
    %324 = arith.addf %322, %323 : vector<2x32xf32>
    %cst_118 = arith.constant 5.000000e-01 : f32
    %325 = vector.broadcast %cst_118 : f32 to vector<2x32xf32>
    %326 = arith.mulf %325, %324 : vector<2x32xf32>
    %327 = arith.mulf %316, %297 : vector<2x32xf32>
    %328 = arith.mulf %308, %318 : vector<2x32xf32>
    %329 = arith.addf %327, %328 : vector<2x32xf32>
    %330 = math.tanh %329 : vector<2x32xf32>
    %331 = arith.mulf %326, %330 : vector<2x32xf32>
    %332 = vector.extract_strided_slice %295 {offsets = [2, 0], sizes = [2, 128], strides = [1, 1]} : vector<16x128xf32> to vector<2x128xf32>
    %cst_119 = arith.constant dense<0.000000e+00> : vector<2x128xf32>
    %333 = tpu.matmul %331, %290, %cst_119 {dimension_numbers = #tpu.dot_dimension_numbers<[1], [0], [0], [1], [0, 0, 1, 1], [], []>} : vector<2x32xf32>, vector<32x128xf32>, vector<2x128xf32> -> vector<2x128xf32>
    %334 = arith.addf %332, %333 : vector<2x128xf32>
    %335 = vector.extract_strided_slice %334 {offsets = [0, 0], sizes = [2, 32], strides = [1, 1]} : vector<2x128xf32> to vector<2x32xf32>
    %cst_120 = arith.constant 5.000000e-01 : f32
    %336 = vector.broadcast %cst_120 : f32 to vector<2x32xf32>
    %337 = arith.mulf %336, %335 : vector<2x32xf32>
    %338 = math.tanh %337 : vector<2x32xf32>
    %cst_121 = arith.constant 1.000000e+00 : f32
    %339 = vector.broadcast %cst_121 : f32 to vector<2x32xf32>
    %340 = arith.addf %338, %339 : vector<2x32xf32>
    %cst_122 = arith.constant 5.000000e-01 : f32
    %341 = vector.broadcast %cst_122 : f32 to vector<2x32xf32>
    %342 = arith.mulf %341, %340 : vector<2x32xf32>
    %343 = vector.extract_strided_slice %334 {offsets = [0, 32], sizes = [2, 32], strides = [1, 1]} : vector<2x128xf32> to vector<2x32xf32>
    %cst_123 = arith.constant 5.000000e-01 : f32
    %344 = vector.broadcast %cst_123 : f32 to vector<2x32xf32>
    %345 = arith.mulf %344, %343 : vector<2x32xf32>
    %346 = math.tanh %345 : vector<2x32xf32>
    %cst_124 = arith.constant 1.000000e+00 : f32
    %347 = vector.broadcast %cst_124 : f32 to vector<2x32xf32>
    %348 = arith.addf %346, %347 : vector<2x32xf32>
    %cst_125 = arith.constant 5.000000e-01 : f32
    %349 = vector.broadcast %cst_125 : f32 to vector<2x32xf32>
    %350 = arith.mulf %349, %348 : vector<2x32xf32>
    %351 = vector.extract_strided_slice %334 {offsets = [0, 64], sizes = [2, 32], strides = [1, 1]} : vector<2x128xf32> to vector<2x32xf32>
    %352 = math.tanh %351 : vector<2x32xf32>
    %353 = vector.extract_strided_slice %334 {offsets = [0, 96], sizes = [2, 32], strides = [1, 1]} : vector<2x128xf32> to vector<2x32xf32>
    %cst_126 = arith.constant 5.000000e-01 : f32
    %354 = vector.broadcast %cst_126 : f32 to vector<2x32xf32>
    %355 = arith.mulf %354, %353 : vector<2x32xf32>
    %356 = math.tanh %355 : vector<2x32xf32>
    %cst_127 = arith.constant 1.000000e+00 : f32
    %357 = vector.broadcast %cst_127 : f32 to vector<2x32xf32>
    %358 = arith.addf %356, %357 : vector<2x32xf32>
    %cst_128 = arith.constant 5.000000e-01 : f32
    %359 = vector.broadcast %cst_128 : f32 to vector<2x32xf32>
    %360 = arith.mulf %359, %358 : vector<2x32xf32>
    %361 = arith.mulf %350, %329 : vector<2x32xf32>
    %362 = arith.mulf %342, %352 : vector<2x32xf32>
    %363 = arith.addf %361, %362 : vector<2x32xf32>
    %364 = math.tanh %363 : vector<2x32xf32>
    %365 = arith.mulf %360, %364 : vector<2x32xf32>
    %366 = vector.extract_strided_slice %295 {offsets = [4, 0], sizes = [2, 128], strides = [1, 1]} : vector<16x128xf32> to vector<2x128xf32>
    %cst_129 = arith.constant dense<0.000000e+00> : vector<2x128xf32>
    %367 = tpu.matmul %365, %290, %cst_129 {dimension_numbers = #tpu.dot_dimension_numbers<[1], [0], [0], [1], [0, 0, 1, 1], [], []>} : vector<2x32xf32>, vector<32x128xf32>, vector<2x128xf32> -> vector<2x128xf32>
    %368 = arith.addf %366, %367 : vector<2x128xf32>
    %369 = vector.extract_strided_slice %368 {offsets = [0, 0], sizes = [2, 32], strides = [1, 1]} : vector<2x128xf32> to vector<2x32xf32>
    %cst_130 = arith.constant 5.000000e-01 : f32
    %370 = vector.broadcast %cst_130 : f32 to vector<2x32xf32>
    %371 = arith.mulf %370, %369 : vector<2x32xf32>
    %372 = math.tanh %371 : vector<2x32xf32>
    %cst_131 = arith.constant 1.000000e+00 : f32
    %373 = vector.broadcast %cst_131 : f32 to vector<2x32xf32>
    %374 = arith.addf %372, %373 : vector<2x32xf32>
    %cst_132 = arith.constant 5.000000e-01 : f32
    %375 = vector.broadcast %cst_132 : f32 to vector<2x32xf32>
    %376 = arith.mulf %375, %374 : vector<2x32xf32>
    %377 = vector.extract_strided_slice %368 {offsets = [0, 32], sizes = [2, 32], strides = [1, 1]} : vector<2x128xf32> to vector<2x32xf32>
    %cst_133 = arith.constant 5.000000e-01 : f32
    %378 = vector.broadcast %cst_133 : f32 to vector<2x32xf32>
    %379 = arith.mulf %378, %377 : vector<2x32xf32>
    %380 = math.tanh %379 : vector<2x32xf32>
    %cst_134 = arith.constant 1.000000e+00 : f32
    %381 = vector.broadcast %cst_134 : f32 to vector<2x32xf32>
    %382 = arith.addf %380, %381 : vector<2x32xf32>
    %cst_135 = arith.constant 5.000000e-01 : f32
    %383 = vector.broadcast %cst_135 : f32 to vector<2x32xf32>
    %384 = arith.mulf %383, %382 : vector<2x32xf32>
    %385 = vector.extract_strided_slice %368 {offsets = [0, 64], sizes = [2, 32], strides = [1, 1]} : vector<2x128xf32> to vector<2x32xf32>
    %386 = math.tanh %385 : vector<2x32xf32>
    %387 = vector.extract_strided_slice %368 {offsets = [0, 96], sizes = [2, 32], strides = [1, 1]} : vector<2x128xf32> to vector<2x32xf32>
    %cst_136 = arith.constant 5.000000e-01 : f32
    %388 = vector.broadcast %cst_136 : f32 to vector<2x32xf32>
    %389 = arith.mulf %388, %387 : vector<2x32xf32>
    %390 = math.tanh %389 : vector<2x32xf32>
    %cst_137 = arith.constant 1.000000e+00 : f32
    %391 = vector.broadcast %cst_137 : f32 to vector<2x32xf32>
    %392 = arith.addf %390, %391 : vector<2x32xf32>
    %cst_138 = arith.constant 5.000000e-01 : f32
    %393 = vector.broadcast %cst_138 : f32 to vector<2x32xf32>
    %394 = arith.mulf %393, %392 : vector<2x32xf32>
    %395 = arith.mulf %384, %363 : vector<2x32xf32>
    %396 = arith.mulf %376, %386 : vector<2x32xf32>
    %397 = arith.addf %395, %396 : vector<2x32xf32>
    %398 = math.tanh %397 : vector<2x32xf32>
    %399 = arith.mulf %394, %398 : vector<2x32xf32>
    %400 = vector.extract_strided_slice %295 {offsets = [6, 0], sizes = [2, 128], strides = [1, 1]} : vector<16x128xf32> to vector<2x128xf32>
    %cst_139 = arith.constant dense<0.000000e+00> : vector<2x128xf32>
    %401 = tpu.matmul %399, %290, %cst_139 {dimension_numbers = #tpu.dot_dimension_numbers<[1], [0], [0], [1], [0, 0, 1, 1], [], []>} : vector<2x32xf32>, vector<32x128xf32>, vector<2x128xf32> -> vector<2x128xf32>
    %402 = arith.addf %400, %401 : vector<2x128xf32>
    %403 = vector.extract_strided_slice %402 {offsets = [0, 0], sizes = [2, 32], strides = [1, 1]} : vector<2x128xf32> to vector<2x32xf32>
    %cst_140 = arith.constant 5.000000e-01 : f32
    %404 = vector.broadcast %cst_140 : f32 to vector<2x32xf32>
    %405 = arith.mulf %404, %403 : vector<2x32xf32>
    %406 = math.tanh %405 : vector<2x32xf32>
    %cst_141 = arith.constant 1.000000e+00 : f32
    %407 = vector.broadcast %cst_141 : f32 to vector<2x32xf32>
    %408 = arith.addf %406, %407 : vector<2x32xf32>
    %cst_142 = arith.constant 5.000000e-01 : f32
    %409 = vector.broadcast %cst_142 : f32 to vector<2x32xf32>
    %410 = arith.mulf %409, %408 : vector<2x32xf32>
    %411 = vector.extract_strided_slice %402 {offsets = [0, 32], sizes = [2, 32], strides = [1, 1]} : vector<2x128xf32> to vector<2x32xf32>
    %cst_143 = arith.constant 5.000000e-01 : f32
    %412 = vector.broadcast %cst_143 : f32 to vector<2x32xf32>
    %413 = arith.mulf %412, %411 : vector<2x32xf32>
    %414 = math.tanh %413 : vector<2x32xf32>
    %cst_144 = arith.constant 1.000000e+00 : f32
    %415 = vector.broadcast %cst_144 : f32 to vector<2x32xf32>
    %416 = arith.addf %414, %415 : vector<2x32xf32>
    %cst_145 = arith.constant 5.000000e-01 : f32
    %417 = vector.broadcast %cst_145 : f32 to vector<2x32xf32>
    %418 = arith.mulf %417, %416 : vector<2x32xf32>
    %419 = vector.extract_strided_slice %402 {offsets = [0, 64], sizes = [2, 32], strides = [1, 1]} : vector<2x128xf32> to vector<2x32xf32>
    %420 = math.tanh %419 : vector<2x32xf32>
    %421 = vector.extract_strided_slice %402 {offsets = [0, 96], sizes = [2, 32], strides = [1, 1]} : vector<2x128xf32> to vector<2x32xf32>
    %cst_146 = arith.constant 5.000000e-01 : f32
    %422 = vector.broadcast %cst_146 : f32 to vector<2x32xf32>
    %423 = arith.mulf %422, %421 : vector<2x32xf32>
    %424 = math.tanh %423 : vector<2x32xf32>
    %cst_147 = arith.constant 1.000000e+00 : f32
    %425 = vector.broadcast %cst_147 : f32 to vector<2x32xf32>
    %426 = arith.addf %424, %425 : vector<2x32xf32>
    %cst_148 = arith.constant 5.000000e-01 : f32
    %427 = vector.broadcast %cst_148 : f32 to vector<2x32xf32>
    %428 = arith.mulf %427, %426 : vector<2x32xf32>
    %429 = arith.mulf %418, %397 : vector<2x32xf32>
    %430 = arith.mulf %410, %420 : vector<2x32xf32>
    %431 = arith.addf %429, %430 : vector<2x32xf32>
    %432 = math.tanh %431 : vector<2x32xf32>
    %433 = arith.mulf %428, %432 : vector<2x32xf32>
    %434 = vector.extract_strided_slice %295 {offsets = [8, 0], sizes = [2, 128], strides = [1, 1]} : vector<16x128xf32> to vector<2x128xf32>
    %cst_149 = arith.constant dense<0.000000e+00> : vector<2x128xf32>
    %435 = tpu.matmul %433, %290, %cst_149 {dimension_numbers = #tpu.dot_dimension_numbers<[1], [0], [0], [1], [0, 0, 1, 1], [], []>} : vector<2x32xf32>, vector<32x128xf32>, vector<2x128xf32> -> vector<2x128xf32>
    %436 = arith.addf %434, %435 : vector<2x128xf32>
    %437 = vector.extract_strided_slice %436 {offsets = [0, 0], sizes = [2, 32], strides = [1, 1]} : vector<2x128xf32> to vector<2x32xf32>
    %cst_150 = arith.constant 5.000000e-01 : f32
    %438 = vector.broadcast %cst_150 : f32 to vector<2x32xf32>
    %439 = arith.mulf %438, %437 : vector<2x32xf32>
    %440 = math.tanh %439 : vector<2x32xf32>
    %cst_151 = arith.constant 1.000000e+00 : f32
    %441 = vector.broadcast %cst_151 : f32 to vector<2x32xf32>
    %442 = arith.addf %440, %441 : vector<2x32xf32>
    %cst_152 = arith.constant 5.000000e-01 : f32
    %443 = vector.broadcast %cst_152 : f32 to vector<2x32xf32>
    %444 = arith.mulf %443, %442 : vector<2x32xf32>
    %445 = vector.extract_strided_slice %436 {offsets = [0, 32], sizes = [2, 32], strides = [1, 1]} : vector<2x128xf32> to vector<2x32xf32>
    %cst_153 = arith.constant 5.000000e-01 : f32
    %446 = vector.broadcast %cst_153 : f32 to vector<2x32xf32>
    %447 = arith.mulf %446, %445 : vector<2x32xf32>
    %448 = math.tanh %447 : vector<2x32xf32>
    %cst_154 = arith.constant 1.000000e+00 : f32
    %449 = vector.broadcast %cst_154 : f32 to vector<2x32xf32>
    %450 = arith.addf %448, %449 : vector<2x32xf32>
    %cst_155 = arith.constant 5.000000e-01 : f32
    %451 = vector.broadcast %cst_155 : f32 to vector<2x32xf32>
    %452 = arith.mulf %451, %450 : vector<2x32xf32>
    %453 = vector.extract_strided_slice %436 {offsets = [0, 64], sizes = [2, 32], strides = [1, 1]} : vector<2x128xf32> to vector<2x32xf32>
    %454 = math.tanh %453 : vector<2x32xf32>
    %455 = vector.extract_strided_slice %436 {offsets = [0, 96], sizes = [2, 32], strides = [1, 1]} : vector<2x128xf32> to vector<2x32xf32>
    %cst_156 = arith.constant 5.000000e-01 : f32
    %456 = vector.broadcast %cst_156 : f32 to vector<2x32xf32>
    %457 = arith.mulf %456, %455 : vector<2x32xf32>
    %458 = math.tanh %457 : vector<2x32xf32>
    %cst_157 = arith.constant 1.000000e+00 : f32
    %459 = vector.broadcast %cst_157 : f32 to vector<2x32xf32>
    %460 = arith.addf %458, %459 : vector<2x32xf32>
    %cst_158 = arith.constant 5.000000e-01 : f32
    %461 = vector.broadcast %cst_158 : f32 to vector<2x32xf32>
    %462 = arith.mulf %461, %460 : vector<2x32xf32>
    %463 = arith.mulf %452, %431 : vector<2x32xf32>
    %464 = arith.mulf %444, %454 : vector<2x32xf32>
    %465 = arith.addf %463, %464 : vector<2x32xf32>
    %466 = math.tanh %465 : vector<2x32xf32>
    %467 = arith.mulf %462, %466 : vector<2x32xf32>
    %468 = vector.extract_strided_slice %295 {offsets = [10, 0], sizes = [2, 128], strides = [1, 1]} : vector<16x128xf32> to vector<2x128xf32>
    %cst_159 = arith.constant dense<0.000000e+00> : vector<2x128xf32>
    %469 = tpu.matmul %467, %290, %cst_159 {dimension_numbers = #tpu.dot_dimension_numbers<[1], [0], [0], [1], [0, 0, 1, 1], [], []>} : vector<2x32xf32>, vector<32x128xf32>, vector<2x128xf32> -> vector<2x128xf32>
    %470 = arith.addf %468, %469 : vector<2x128xf32>
    %471 = vector.extract_strided_slice %470 {offsets = [0, 0], sizes = [2, 32], strides = [1, 1]} : vector<2x128xf32> to vector<2x32xf32>
    %cst_160 = arith.constant 5.000000e-01 : f32
    %472 = vector.broadcast %cst_160 : f32 to vector<2x32xf32>
    %473 = arith.mulf %472, %471 : vector<2x32xf32>
    %474 = math.tanh %473 : vector<2x32xf32>
    %cst_161 = arith.constant 1.000000e+00 : f32
    %475 = vector.broadcast %cst_161 : f32 to vector<2x32xf32>
    %476 = arith.addf %474, %475 : vector<2x32xf32>
    %cst_162 = arith.constant 5.000000e-01 : f32
    %477 = vector.broadcast %cst_162 : f32 to vector<2x32xf32>
    %478 = arith.mulf %477, %476 : vector<2x32xf32>
    %479 = vector.extract_strided_slice %470 {offsets = [0, 32], sizes = [2, 32], strides = [1, 1]} : vector<2x128xf32> to vector<2x32xf32>
    %cst_163 = arith.constant 5.000000e-01 : f32
    %480 = vector.broadcast %cst_163 : f32 to vector<2x32xf32>
    %481 = arith.mulf %480, %479 : vector<2x32xf32>
    %482 = math.tanh %481 : vector<2x32xf32>
    %cst_164 = arith.constant 1.000000e+00 : f32
    %483 = vector.broadcast %cst_164 : f32 to vector<2x32xf32>
    %484 = arith.addf %482, %483 : vector<2x32xf32>
    %cst_165 = arith.constant 5.000000e-01 : f32
    %485 = vector.broadcast %cst_165 : f32 to vector<2x32xf32>
    %486 = arith.mulf %485, %484 : vector<2x32xf32>
    %487 = vector.extract_strided_slice %470 {offsets = [0, 64], sizes = [2, 32], strides = [1, 1]} : vector<2x128xf32> to vector<2x32xf32>
    %488 = math.tanh %487 : vector<2x32xf32>
    %489 = vector.extract_strided_slice %470 {offsets = [0, 96], sizes = [2, 32], strides = [1, 1]} : vector<2x128xf32> to vector<2x32xf32>
    %cst_166 = arith.constant 5.000000e-01 : f32
    %490 = vector.broadcast %cst_166 : f32 to vector<2x32xf32>
    %491 = arith.mulf %490, %489 : vector<2x32xf32>
    %492 = math.tanh %491 : vector<2x32xf32>
    %cst_167 = arith.constant 1.000000e+00 : f32
    %493 = vector.broadcast %cst_167 : f32 to vector<2x32xf32>
    %494 = arith.addf %492, %493 : vector<2x32xf32>
    %cst_168 = arith.constant 5.000000e-01 : f32
    %495 = vector.broadcast %cst_168 : f32 to vector<2x32xf32>
    %496 = arith.mulf %495, %494 : vector<2x32xf32>
    %497 = arith.mulf %486, %465 : vector<2x32xf32>
    %498 = arith.mulf %478, %488 : vector<2x32xf32>
    %499 = arith.addf %497, %498 : vector<2x32xf32>
    %500 = math.tanh %499 : vector<2x32xf32>
    %501 = arith.mulf %496, %500 : vector<2x32xf32>
    %502 = vector.extract_strided_slice %295 {offsets = [12, 0], sizes = [2, 128], strides = [1, 1]} : vector<16x128xf32> to vector<2x128xf32>
    %cst_169 = arith.constant dense<0.000000e+00> : vector<2x128xf32>
    %503 = tpu.matmul %501, %290, %cst_169 {dimension_numbers = #tpu.dot_dimension_numbers<[1], [0], [0], [1], [0, 0, 1, 1], [], []>} : vector<2x32xf32>, vector<32x128xf32>, vector<2x128xf32> -> vector<2x128xf32>
    %504 = arith.addf %502, %503 : vector<2x128xf32>
    %505 = vector.extract_strided_slice %504 {offsets = [0, 0], sizes = [2, 32], strides = [1, 1]} : vector<2x128xf32> to vector<2x32xf32>
    %cst_170 = arith.constant 5.000000e-01 : f32
    %506 = vector.broadcast %cst_170 : f32 to vector<2x32xf32>
    %507 = arith.mulf %506, %505 : vector<2x32xf32>
    %508 = math.tanh %507 : vector<2x32xf32>
    %cst_171 = arith.constant 1.000000e+00 : f32
    %509 = vector.broadcast %cst_171 : f32 to vector<2x32xf32>
    %510 = arith.addf %508, %509 : vector<2x32xf32>
    %cst_172 = arith.constant 5.000000e-01 : f32
    %511 = vector.broadcast %cst_172 : f32 to vector<2x32xf32>
    %512 = arith.mulf %511, %510 : vector<2x32xf32>
    %513 = vector.extract_strided_slice %504 {offsets = [0, 32], sizes = [2, 32], strides = [1, 1]} : vector<2x128xf32> to vector<2x32xf32>
    %cst_173 = arith.constant 5.000000e-01 : f32
    %514 = vector.broadcast %cst_173 : f32 to vector<2x32xf32>
    %515 = arith.mulf %514, %513 : vector<2x32xf32>
    %516 = math.tanh %515 : vector<2x32xf32>
    %cst_174 = arith.constant 1.000000e+00 : f32
    %517 = vector.broadcast %cst_174 : f32 to vector<2x32xf32>
    %518 = arith.addf %516, %517 : vector<2x32xf32>
    %cst_175 = arith.constant 5.000000e-01 : f32
    %519 = vector.broadcast %cst_175 : f32 to vector<2x32xf32>
    %520 = arith.mulf %519, %518 : vector<2x32xf32>
    %521 = vector.extract_strided_slice %504 {offsets = [0, 64], sizes = [2, 32], strides = [1, 1]} : vector<2x128xf32> to vector<2x32xf32>
    %522 = math.tanh %521 : vector<2x32xf32>
    %523 = vector.extract_strided_slice %504 {offsets = [0, 96], sizes = [2, 32], strides = [1, 1]} : vector<2x128xf32> to vector<2x32xf32>
    %cst_176 = arith.constant 5.000000e-01 : f32
    %524 = vector.broadcast %cst_176 : f32 to vector<2x32xf32>
    %525 = arith.mulf %524, %523 : vector<2x32xf32>
    %526 = math.tanh %525 : vector<2x32xf32>
    %cst_177 = arith.constant 1.000000e+00 : f32
    %527 = vector.broadcast %cst_177 : f32 to vector<2x32xf32>
    %528 = arith.addf %526, %527 : vector<2x32xf32>
    %cst_178 = arith.constant 5.000000e-01 : f32
    %529 = vector.broadcast %cst_178 : f32 to vector<2x32xf32>
    %530 = arith.mulf %529, %528 : vector<2x32xf32>
    %531 = arith.mulf %520, %499 : vector<2x32xf32>
    %532 = arith.mulf %512, %522 : vector<2x32xf32>
    %533 = arith.addf %531, %532 : vector<2x32xf32>
    %534 = math.tanh %533 : vector<2x32xf32>
    %535 = arith.mulf %530, %534 : vector<2x32xf32>
    %536 = vector.extract_strided_slice %295 {offsets = [14, 0], sizes = [2, 128], strides = [1, 1]} : vector<16x128xf32> to vector<2x128xf32>
    %cst_179 = arith.constant dense<0.000000e+00> : vector<2x128xf32>
    %537 = tpu.matmul %535, %290, %cst_179 {dimension_numbers = #tpu.dot_dimension_numbers<[1], [0], [0], [1], [0, 0, 1, 1], [], []>} : vector<2x32xf32>, vector<32x128xf32>, vector<2x128xf32> -> vector<2x128xf32>
    %538 = arith.addf %536, %537 : vector<2x128xf32>
    %539 = vector.extract_strided_slice %538 {offsets = [0, 0], sizes = [2, 32], strides = [1, 1]} : vector<2x128xf32> to vector<2x32xf32>
    %cst_180 = arith.constant 5.000000e-01 : f32
    %540 = vector.broadcast %cst_180 : f32 to vector<2x32xf32>
    %541 = arith.mulf %540, %539 : vector<2x32xf32>
    %542 = math.tanh %541 : vector<2x32xf32>
    %cst_181 = arith.constant 1.000000e+00 : f32
    %543 = vector.broadcast %cst_181 : f32 to vector<2x32xf32>
    %544 = arith.addf %542, %543 : vector<2x32xf32>
    %cst_182 = arith.constant 5.000000e-01 : f32
    %545 = vector.broadcast %cst_182 : f32 to vector<2x32xf32>
    %546 = arith.mulf %545, %544 : vector<2x32xf32>
    %547 = vector.extract_strided_slice %538 {offsets = [0, 32], sizes = [2, 32], strides = [1, 1]} : vector<2x128xf32> to vector<2x32xf32>
    %cst_183 = arith.constant 5.000000e-01 : f32
    %548 = vector.broadcast %cst_183 : f32 to vector<2x32xf32>
    %549 = arith.mulf %548, %547 : vector<2x32xf32>
    %550 = math.tanh %549 : vector<2x32xf32>
    %cst_184 = arith.constant 1.000000e+00 : f32
    %551 = vector.broadcast %cst_184 : f32 to vector<2x32xf32>
    %552 = arith.addf %550, %551 : vector<2x32xf32>
    %cst_185 = arith.constant 5.000000e-01 : f32
    %553 = vector.broadcast %cst_185 : f32 to vector<2x32xf32>
    %554 = arith.mulf %553, %552 : vector<2x32xf32>
    %555 = vector.extract_strided_slice %538 {offsets = [0, 64], sizes = [2, 32], strides = [1, 1]} : vector<2x128xf32> to vector<2x32xf32>
    %556 = math.tanh %555 : vector<2x32xf32>
    %557 = vector.extract_strided_slice %538 {offsets = [0, 96], sizes = [2, 32], strides = [1, 1]} : vector<2x128xf32> to vector<2x32xf32>
    %cst_186 = arith.constant 5.000000e-01 : f32
    %558 = vector.broadcast %cst_186 : f32 to vector<2x32xf32>
    %559 = arith.mulf %558, %557 : vector<2x32xf32>
    %560 = math.tanh %559 : vector<2x32xf32>
    %cst_187 = arith.constant 1.000000e+00 : f32
    %561 = vector.broadcast %cst_187 : f32 to vector<2x32xf32>
    %562 = arith.addf %560, %561 : vector<2x32xf32>
    %cst_188 = arith.constant 5.000000e-01 : f32
    %563 = vector.broadcast %cst_188 : f32 to vector<2x32xf32>
    %564 = arith.mulf %563, %562 : vector<2x32xf32>
    %565 = arith.mulf %554, %533 : vector<2x32xf32>
    %566 = arith.mulf %546, %556 : vector<2x32xf32>
    %567 = arith.addf %565, %566 : vector<2x32xf32>
    %568 = math.tanh %567 : vector<2x32xf32>
    %569 = arith.mulf %564, %568 : vector<2x32xf32>
    %c0_189 = arith.constant 0 : index
    %c0_190 = arith.constant 0 : index
    %570 = vector.load %arg7[%c0_189, %c0_190] : memref<32x4xf32, #tpu.memory_space<vmem>>, vector<32x4xf32>
    %cst_191 = arith.constant dense<0.000000e+00> : vector<2x4xf32>
    %571 = tpu.matmul %569, %570, %cst_191 {dimension_numbers = #tpu.dot_dimension_numbers<[1], [0], [0], [1], [0, 0, 1, 1], [], []>} : vector<2x32xf32>, vector<32x4xf32>, vector<2x4xf32> -> vector<2x4xf32>
    %c0_192 = arith.constant 0 : index
    %c0_193 = arith.constant 0 : index
    %572 = vector.load %arg8[%c0_192, %c0_193] : memref<1x4xf32, #tpu.memory_space<vmem>>, vector<1x4xf32>
    %573 = vector.broadcast %572 : vector<1x4xf32> to vector<2x4xf32>
    %574 = arith.addf %571, %573 : vector<2x4xf32>
    %c0_194 = arith.constant 0 : index
    %c0_195 = arith.constant 0 : index
    %575 = vector.load %arg9[%c0_194, %c0_195] : memref<2x4xf32, #tpu.memory_space<vmem>>, vector<2x4xf32>
    tpu.vector_store %arg9[%c0_194, %c0_195], %574 {strides = array<i32>} : memref<2x4xf32, #tpu.memory_space<vmem>>, vector<2x4xf32>,
    return
  }
}

</mosaic_0001>

<llo_original>
// kernel: tpu_custom_call.1
$region0: #{tpu_custom_call.1}
  #allocation0 [shape = 'u32[]', space=smem, size = 0x4, offset = 0x4, fixed_abs, tag = 'smem constant byte address 0x4 - core index']
  #allocation1 [shape = 'u32[144,128]{1,0:T(1,128)}', space=vmem, size = 0x12000, scoped, tag = 'internal scratch']
  #allocation2 [shape = 'f32[16,32]{1,0:T(8,128)}', space=vmem, size = 0x2000, scoped, tag = 'scratch operand']
  %s0 = inlined_call_operand.vmem [shape: f32[16,4], index: 0, kind: input, shape index: {}]
  %s1 = inlined_call_operand.hbm [shape: f32[4,128], index: 1, kind: input, shape index: {}]
  %s2 = inlined_call_operand.vmem [shape: f32[32,128], index: 2, kind: input, shape index: {}]
  %s3 = inlined_call_operand.hbm [shape: f32[1,128], index: 3, kind: input, shape index: {}]
  %s4 = inlined_call_operand.hbm [shape: f32[32,128], index: 4, kind: input, shape index: {}]
  %s5 = inlined_call_operand.vmem [shape: f32[32,128], index: 5, kind: input, shape index: {}]
  %s6 = inlined_call_operand.hbm [shape: f32[1,128], index: 6, kind: input, shape index: {}]
  %s7 = inlined_call_operand.vmem [shape: f32[32,4], index: 7, kind: input, shape index: {}]
  %s8 = inlined_call_operand.vmem [shape: f32[1,4], index: 8, kind: input, shape index: {}]
  %s9 = inlined_call_operand.hbm [shape: f32[2,4], index: 9, kind: output, shape index: {}]
  %s10 = sld [smem:[#allocation0]]
  $region62: #{tpu_custom_call.1} parent=0
    _
  %s12 = ssub.s32 1, %s10
  %s13 = scalar_select 0, %s12, %s10
  $region1: #{tpu_custom_call.1} parent=0
    #allocation3 [shape = 'u8[2048]{0}', space=vmem, size = 0x800, scoped, tag = 'input window, operand 1, single buffered']
    #allocation4 [shape = 's32[1]{0}', space=sflag, size = 0x4, scoped, tag = 'scoped memory for tpu_custom_call.1']
    #allocation5 [shape = 's32[1]{0}', space=sflag, size = 0x4, scoped, tag = 'scoped memory for tpu_custom_call.1']
    #allocation6 [shape = 'u8[512]{0}', space=vmem, size = 0x400, scoped, tag = 'input window, operand 3, single buffered']
    #allocation7 [shape = 's32[1]{0}', space=sflag, size = 0x4, scoped, tag = 'scoped memory for tpu_custom_call.1']
    #allocation8 [shape = 'u8[16384]{0}', space=vmem, size = 0x4000, scoped, tag = 'input window, operand 4, single buffered']
    #allocation9 [shape = 'u8[512]{0}', space=vmem, size = 0x400, scoped, tag = 'input window, operand 6, single buffered']
    #allocation10 [shape = 's32[1]{0}', space=sflag, size = 0x4, scoped, tag = 'scoped memory for tpu_custom_call.1']
    #allocation11 [shape = 'u8[1024]{0}', space=vmem, size = 0x400, scoped, tag = 'output window, operand 0, single buffered']
    %14 = vsyncpa [#allocation4], 0
    %15 = vsyncpa [#allocation7], 0
    %16 = vsyncpa [#allocation10], 0
    %17 = vsyncpa [#allocation5], 0
    // Predicated region
    $region2: #{tpu_custom_call.1} parent=1 // pred_check
      _
    $region3: #{tpu_custom_call.1} parent=1 // pred_check_branch
      %19 = sbr.rel (0) target = $region5
    $region4: #{tpu_custom_call.1} parent=1 // pred_region
      _
    $region5: #{tpu_custom_call.1} parent=1 // pred_fallthru
      _
    // Predicated region
    $region6: #{tpu_custom_call.1} parent=1 // pred_check
      _
    $region7: #{tpu_custom_call.1} parent=1 // pred_check_branch
      %21 = sbr.rel (0) target = $region9
    $region8: #{tpu_custom_call.1} parent=1 // pred_region
      %s23 = ssub.s32 64, 64
      %24 = vsyncadd [#allocation4], %s23
      %s26 = sshll.u32 [#allocation3], 4
      %s27 = int_to_ptr.vmem [resolvable:$true] %s26
      %29 = dma.hbm_to_vmem [thread:$0]  %s1, 64, %s27, [#allocation4]
    $region9: #{tpu_custom_call.1} parent=1 // pred_fallthru
      _
    // Predicated region
    $region10: #{tpu_custom_call.1} parent=1 // pred_check
      _
    $region11: #{tpu_custom_call.1} parent=1 // pred_check_branch
      %31 = sbr.rel (0) target = $region13
    $region12: #{tpu_custom_call.1} parent=1 // pred_region
      _
    $region13: #{tpu_custom_call.1} parent=1 // pred_fallthru
      _
    // Predicated region
    $region14: #{tpu_custom_call.1} parent=1 // pred_check
      _
    $region15: #{tpu_custom_call.1} parent=1 // pred_check_branch
      %33 = sbr.rel (0) target = $region17
    $region16: #{tpu_custom_call.1} parent=1 // pred_region
      %s35 = ssub.s32 16, 16
      %36 = vsyncadd [#allocation7], %s35
      %s38 = sshll.u32 [#allocation6], 4
      %s39 = int_to_ptr.vmem [resolvable:$true] %s38
      %41 = dma.hbm_to_vmem [thread:$0]  %s3, 16, %s39, [#allocation7]
    $region17: #{tpu_custom_call.1} parent=1 // pred_fallthru
      _
    // Predicated region
    $region18: #{tpu_custom_call.1} parent=1 // pred_check
      _
    $region19: #{tpu_custom_call.1} parent=1 // pred_check_branch
      %43 = sbr.rel (0) target = $region21
    $region20: #{tpu_custom_call.1} parent=1 // pred_region
      %s45 = ssub.s32 512, 512
      %46 = vsyncadd [#allocation7], %s45
      %s47 = sshll.u32 [#allocation8], 4
      %s48 = int_to_ptr.vmem [resolvable:$true] %s47
      %53 = dma.hbm_to_vmem [thread:$0]  %s4, 512, %s48, [#allocation7], 128, 128, 8
    $region21: #{tpu_custom_call.1} parent=1 // pred_fallthru
      _
    // Predicated region
    $region22: #{tpu_custom_call.1} parent=1 // pred_check
      _
    $region23: #{tpu_custom_call.1} parent=1 // pred_check_branch
      %55 = sbr.rel (0) target = $region25
    $region24: #{tpu_custom_call.1} parent=1 // pred_region
      _
    $region25: #{tpu_custom_call.1} parent=1 // pred_fallthru
      _
    // Predicated region
    $region26: #{tpu_custom_call.1} parent=1 // pred_check
      _
    $region27: #{tpu_custom_call.1} parent=1 // pred_check_branch
      %57 = sbr.rel (0) target = $region29
    $region28: #{tpu_custom_call.1} parent=1 // pred_region
      %s59 = ssub.s32 16, 16
      %60 = vsyncadd [#allocation10], %s59
      %s62 = sshll.u32 [#allocation9], 4
      %s63 = int_to_ptr.vmem [resolvable:$true] %s62
      %65 = dma.hbm_to_vmem [thread:$0]  %s6, 16, %s63, [#allocation10]
    $region29: #{tpu_custom_call.1} parent=1 // pred_fallthru
      _
    // Predicated region
    $region30: #{tpu_custom_call.1} parent=1 // pred_check
      _
    $region31: #{tpu_custom_call.1} parent=1 // pred_check_branch
      %67 = sbr.rel (0) target = $region33
    $region32: #{tpu_custom_call.1} parent=1 // pred_region
      _
    $region33: #{tpu_custom_call.1} parent=1 // pred_fallthru
      _
    // Predicated region
    $region34: #{tpu_custom_call.1} parent=1 // pred_check
      _
    $region35: #{tpu_custom_call.1} parent=1 // pred_check_branch
      %69 = sbr.rel (0) target = $region37
    $region36: #{tpu_custom_call.1} parent=1 // pred_region
      _
    $region37: #{tpu_custom_call.1} parent=1 // pred_fallthru
      _
    // Predicated region
    $region38: #{tpu_custom_call.1} parent=1 // pred_check
      _
    $region39: #{tpu_custom_call.1} parent=1 // pred_check_branch
      %71 = sbr.rel (0) target = $region41
    $region40: #{tpu_custom_call.1} parent=1 // pred_region
      %72 = dma.done [#allocation4], 64
    $region41: #{tpu_custom_call.1} parent=1 // pred_fallthru
      _
    // Predicated region
    $region42: #{tpu_custom_call.1} parent=1 // pred_check
      _
    $region43: #{tpu_custom_call.1} parent=1 // pred_check_branch
      %74 = sbr.rel (0) target = $region45
    $region44: #{tpu_custom_call.1} parent=1 // pred_region
      %75 = dma.done [#allocation7], 16
    $region45: #{tpu_custom_call.1} parent=1 // pred_fallthru
      _
    // Predicated region
    $region46: #{tpu_custom_call.1} parent=1 // pred_check
      _
    $region47: #{tpu_custom_call.1} parent=1 // pred_check_branch
      %77 = sbr.rel (0) target = $region49
    $region48: #{tpu_custom_call.1} parent=1 // pred_region
      %78 = dma.done [#allocation7], 512
    $region49: #{tpu_custom_call.1} parent=1 // pred_fallthru
      _
    // Predicated region
    $region50: #{tpu_custom_call.1} parent=1 // pred_check
      _
    $region51: #{tpu_custom_call.1} parent=1 // pred_check_branch
      %80 = sbr.rel (0) target = $region53
    $region52: #{tpu_custom_call.1} parent=1 // pred_region
      %81 = dma.done [#allocation10], 16
    $region53: #{tpu_custom_call.1} parent=1 // pred_fallthru
      _
    %v82 = vld [vmem:[#allocation3] sm:$0xf]
    %v83 = vld [vmem:[%s2] sm:$0xff]
    %v84 = vld [vmem:[%s2 + $0x8] sm:$0xff]
    %v85 = vld [vmem:[%s2 + $0x10] sm:$0xff]
    %v86 = vld [vmem:[%s2 + $0x18] sm:$0xff]
    %v87 = vld [vmem:[#allocation6] sm:$0x1]
    %v88 = vld [vmem:[%s0] sm:$0xff]
    %v89 = vld [vmem:[%s0 + $0x8] sm:$0xff]
    %v91 = vlaneseq
    %v92 = vshrl.u32 %v91, 7
    %v93 = vsub.s32 0, %v92
    %v94 = vrot.slane %v87, %v93
    %vm96 = vcmask 31744
    %v98 = vsel %vm96, %v88, 0
    %v101 = vsel %vm96, %v89, 0
    %vm103 = vcmask 1043456
    %v105 = vsel %vm103, %v82, 0
    %107 = vmatprep.subr.mxu0 0.0
    %108 = vmatpush1.msra.mxu0 0.0
    %109 = vmatprep.subr.mxu0 0.0
    %110 = vmatpush1.msra.mxu0 0.0
    %111 = vmatprep.subr.mxu0 0.0
    %112 = vmatpush1.msra.mxu0 0.0
    %113 = vmatprep.subr.mxu0 0.0
    %114 = vmatpush1.msra.mxu0 0.0
    %115 = vmatprep.subr.mxu0 0.0
    %116 = vmatpush1.msra.mxu0 0.0
    %117 = vmatprep.subr.mxu0 0.0
    %118 = vmatpush1.msra.mxu0 0.0
    %119 = vmatprep.subr.mxu0 0.0
    %120 = vmatpush1.msra.mxu0 0.0
    %121 = vmatprep.subr.mxu0 0.0
    %122 = vmatpush1.msra.mxu0 0.0
    %123 = vmatprep.subr.mxu0 0.0
    %124 = vmatpush1.msra.mxu0 0.0
    %125 = vmatprep.subr.mxu0 0.0
    %126 = vmatpush1.msra.mxu0 0.0
    %127 = vmatprep.subr.mxu0 0.0
    %128 = vmatpush1.msra.mxu0 0.0
    %129 = vmatprep.subr.mxu0 0.0
    %130 = vmatpush1.msra.mxu0 0.0
    %131 = vmatprep.subr.mxu0 0.0
    %132 = vmatpush1.msra.mxu0 0.0
    %133 = vmatprep.subr.mxu0 0.0
    %134 = vmatpush1.msra.mxu0 0.0
    %135 = vmatprep.subr.mxu0 0.0
    %136 = vmatpush1.msra.mxu0 0.0
    %137 = vmatprep.subr.mxu0 0.0
    %138 = vmatpush1.msra.mxu0 %v105
    %139 = vmatprep.subr.mxu0 0.0
    %140 = vmatpush2.msra.mxu0 0.0
    %141 = vmatprep.subr.mxu0 0.0
    %142 = vmatpush2.msra.mxu0 0.0
    %143 = vmatprep.subr.mxu0 0.0
    %144 = vmatpush2.msra.mxu0 0.0
    %145 = vmatprep.subr.mxu0 0.0
    %146 = vmatpush2.msra.mxu0 0.0
    %147 = vmatprep.subr.mxu0 0.0
    %148 = vmatpush2.msra.mxu0 0.0
    %149 = vmatprep.subr.mxu0 0.0
    %150 = vmatpush2.msra.mxu0 0.0
    %151 = vmatprep.subr.mxu0 0.0
    %152 = vmatpush2.msra.mxu0 0.0
    %153 = vmatprep.subr.mxu0 0.0
    %154 = vmatpush2.msra.mxu0 0.0
    %155 = vmatprep.subr.mxu0 0.0
    %156 = vmatpush2.msra.mxu0 0.0
    %157 = vmatprep.subr.mxu0 0.0
    %158 = vmatpush2.msra.mxu0 0.0
    %159 = vmatprep.subr.mxu0 0.0
    %160 = vmatpush2.msra.mxu0 0.0
    %161 = vmatprep.subr.mxu0 0.0
    %162 = vmatpush2.msra.mxu0 0.0
    %163 = vmatprep.subr.mxu0 0.0
    %164 = vmatpush2.msra.mxu0 0.0
    %165 = vmatprep.subr.mxu0 0.0
    %166 = vmatpush2.msra.mxu0 0.0
    %167 = vmatprep.subr.mxu0 0.0
    %168 = vmatpush2.msra.mxu0 0.0
    %169 = vmatprep.subr.mxu0 0.0
    %170 = vmatpush2.msra.mxu0 0.0
    %171 = vmatprep.mubr.f32.mxu0 0.0
    %172 = vmatmul.mubr.f32.gmra.mxu0 %v98
    %v173 = vpop.f32.mrf.mxu0
    %v174 = vadd.f32 %v94, %v173
    %v175 = vpop.f32.mrf.mxu0
    %176 = vmatprep.mubr.f32.mxu0 0.0
    %177 = vmatmul.mubr.f32.gmra.mxu0 %v101
    %v178 = vpop.f32.mrf.mxu0
    %v179 = vadd.f32 %v94, %v178
    %v180 = vpop.f32.mrf.mxu0
    %181 = vdwg.mxu0
    %vm182 = vcmask 261120
    %v184 = vsel %vm182, 0.0, 0
    %186 = vmatprep.subr.mxu0 0.0
    %187 = vmatpush1.msra.mxu0 0.0
    %188 = vmatprep.subr.mxu0 0.0
    %189 = vmatpush1.msra.mxu0 0.0
    %190 = vmatprep.subr.mxu0 0.0
    %191 = vmatpush1.msra.mxu0 0.0
    %192 = vmatprep.subr.mxu0 0.0
    %193 = vmatpush1.msra.mxu0 0.0
    %194 = vmatprep.subr.mxu0 0.0
    %195 = vmatpush1.msra.mxu0 0.0
    %196 = vmatprep.subr.mxu0 0.0
    %197 = vmatpush1.msra.mxu0 0.0
    %198 = vmatprep.subr.mxu0 0.0
    %199 = vmatpush1.msra.mxu0 0.0
    %200 = vmatprep.subr.mxu0 0.0
    %201 = vmatpush1.msra.mxu0 0.0
    %202 = vmatprep.subr.mxu0 0.0
    %203 = vmatpush1.msra.mxu0 0.0
    %204 = vmatprep.subr.mxu0 0.0
    %205 = vmatpush1.msra.mxu0 0.0
    %206 = vmatprep.subr.mxu0 0.0
    %207 = vmatpush1.msra.mxu0 0.0
    %208 = vmatprep.subr.mxu0 0.0
    %209 = vmatpush1.msra.mxu0 0.0
    %210 = vmatprep.subr.mxu0 0.0
    %211 = vmatpush1.msra.mxu0 %v86
    %212 = vmatprep.subr.mxu0 0.0
    %213 = vmatpush1.msra.mxu0 %v85
    %214 = vmatprep.subr.mxu0 0.0
    %215 = vmatpush1.msra.mxu0 %v84
    %216 = vmatprep.subr.mxu0 0.0
    %217 = vmatpush1.msra.mxu0 %v83
    %218 = vmatprep.subr.mxu0 0.0
    %219 = vmatpush2.msra.mxu0 0.0
    %220 = vmatprep.subr.mxu0 0.0
    %221 = vmatpush2.msra.mxu0 0.0
    %222 = vmatprep.subr.mxu0 0.0
    %223 = vmatpush2.msra.mxu0 0.0
    %224 = vmatprep.subr.mxu0 0.0
    %225 = vmatpush2.msra.mxu0 0.0
    %226 = vmatprep.subr.mxu0 0.0
    %227 = vmatpush2.msra.mxu0 0.0
    %228 = vmatprep.subr.mxu0 0.0
    %229 = vmatpush2.msra.mxu0 0.0
    %230 = vmatprep.subr.mxu0 0.0
    %231 = vmatpush2.msra.mxu0 0.0
    %232 = vmatprep.subr.mxu0 0.0
    %233 = vmatpush2.msra.mxu0 0.0
    %234 = vmatprep.subr.mxu0 0.0
    %235 = vmatpush2.msra.mxu0 0.0
    %236 = vmatprep.subr.mxu0 0.0
    %237 = vmatpush2.msra.mxu0 0.0
    %238 = vmatprep.subr.mxu0 0.0
    %239 = vmatpush2.msra.mxu0 0.0
    %240 = vmatprep.subr.mxu0 0.0
    %241 = vmatpush2.msra.mxu0 0.0
    %242 = vmatprep.subr.mxu0 0.0
    %243 = vmatpush2.msra.mxu0 0.0
    %244 = vmatprep.subr.mxu0 0.0
    %245 = vmatpush2.msra.mxu0 0.0
    %246 = vmatprep.subr.mxu0 0.0
    %247 = vmatpush2.msra.mxu0 0.0
    %248 = vmatprep.subr.mxu0 0.0
    %249 = vmatpush2.msra.mxu0 0.0
    %250 = vmatprep.mubr.f32.mxu0 0.0
    %251 = vmatmul.mubr.f32.gmra.mxu0 %v184
    %v252 = vpop.f32.mrf.mxu0
    %v253 = vadd.f32 0.0, %v252
    %v254 = vpop.f32.mrf.mxu0
    %255 = vdwg.mxu0
    %v256 = vadd.f32 %v174, %v253
    %v257 = vmul.f32 %v256, 0.5
    %v258 = vtanh.pop %v257
    %v259 = vadd.f32 %v258, 1.0
    %v260 = vmul.f32 %v259, 0.5
    %v261 = vtanh.pop %v256
    %v262 = vmul.f32 %v260, 0.0
    %264 = vrot.lane.b32.xlu0 %v261, 64
    %v265 = vpop.permute.xlu0 %264
    %v267 = vmul.f32 %v260, %v265
    %269 = vrot.lane.b32.xlu0 %v267, 32
    %v270 = vpop.permute.xlu0 %269
    %v272 = vadd.f32 %v262, %v270
    %v273 = vtanh.pop %v272
    %275 = vrot.lane.b32.xlu0 %v273, 64
    %v276 = vpop.permute.xlu0 %275
    %v278 = vmul.f32 %v260, %v276
    %280 = vrot.lane.b32.xlu0 %v278, 32
    %v281 = vpop.permute.xlu0 %280
    %vm283 = vcmask 254976
    %284 = vst.msk [vmem:[#allocation2] sm:$0x3] %vm283, %v281
    %v285 = vsel %vm182, %v281, 0
    %287 = vmatprep.subr.mxu0 0.0
    %288 = vmatpush1.msra.mxu0 0.0
    %289 = vmatprep.subr.mxu0 0.0
    %290 = vmatpush1.msra.mxu0 0.0
    %291 = vmatprep.subr.mxu0 0.0
    %292 = vmatpush1.msra.mxu0 0.0
    %293 = vmatprep.subr.mxu0 0.0
    %294 = vmatpush1.msra.mxu0 0.0
    %295 = vmatprep.subr.mxu0 0.0
    %296 = vmatpush1.msra.mxu0 0.0
    %297 = vmatprep.subr.mxu0 0.0
    %298 = vmatpush1.msra.mxu0 0.0
    %299 = vmatprep.subr.mxu0 0.0
    %300 = vmatpush1.msra.mxu0 0.0
    %301 = vmatprep.subr.mxu0 0.0
    %302 = vmatpush1.msra.mxu0 0.0
    %303 = vmatprep.subr.mxu0 0.0
    %304 = vmatpush1.msra.mxu0 0.0
    %305 = vmatprep.subr.mxu0 0.0
    %306 = vmatpush1.msra.mxu0 0.0
    %307 = vmatprep.subr.mxu0 0.0
    %308 = vmatpush1.msra.mxu0 0.0
    %309 = vmatprep.subr.mxu0 0.0
    %310 = vmatpush1.msra.mxu0 0.0
    %311 = vmatprep.subr.mxu0 0.0
    %312 = vmatpush1.msra.mxu0 %v86
    %313 = vmatprep.subr.mxu0 0.0
    %314 = vmatpush1.msra.mxu0 %v85
    %315 = vmatprep.subr.mxu0 0.0
    %316 = vmatpush1.msra.mxu0 %v84
    %317 = vmatprep.subr.mxu0 0.0
    %318 = vmatpush1.msra.mxu0 %v83
    %319 = vmatprep.subr.mxu0 0.0
    %320 = vmatpush2.msra.mxu0 0.0
    %321 = vmatprep.subr.mxu0 0.0
    %322 = vmatpush2.msra.mxu0 0.0
    %323 = vmatprep.subr.mxu0 0.0
    %324 = vmatpush2.msra.mxu0 0.0
    %325 = vmatprep.subr.mxu0 0.0
    %326 = vmatpush2.msra.mxu0 0.0
    %327 = vmatprep.subr.mxu0 0.0
    %328 = vmatpush2.msra.mxu0 0.0
    %329 = vmatprep.subr.mxu0 0.0
    %330 = vmatpush2.msra.mxu0 0.0
    %331 = vmatprep.subr.mxu0 0.0
    %332 = vmatpush2.msra.mxu0 0.0
    %333 = vmatprep.subr.mxu0 0.0
    %334 = vmatpush2.msra.mxu0 0.0
    %335 = vmatprep.subr.mxu0 0.0
    %336 = vmatpush2.msra.mxu0 0.0
    %337 = vmatprep.subr.mxu0 0.0
    %338 = vmatpush2.msra.mxu0 0.0
    %339 = vmatprep.subr.mxu0 0.0
    %340 = vmatpush2.msra.mxu0 0.0
    %341 = vmatprep.subr.mxu0 0.0
    %342 = vmatpush2.msra.mxu0 0.0
    %343 = vmatprep.subr.mxu0 0.0
    %344 = vmatpush2.msra.mxu0 0.0
    %345 = vmatprep.subr.mxu0 0.0
    %346 = vmatpush2.msra.mxu0 0.0
    %347 = vmatprep.subr.mxu0 0.0
    %348 = vmatpush2.msra.mxu0 0.0
    %349 = vmatprep.subr.mxu0 0.0
    %350 = vmatpush2.msra.mxu0 0.0
    %351 = vmatprep.mubr.f32.mxu0 0.0
    %352 = vmatmul.mubr.f32.gmra.mxu0 %v285
    %v353 = vpop.f32.mrf.mxu0
    %v354 = vadd.f32 0.0, %v353
    %v355 = vpop.f32.mrf.mxu0
    %356 = vdwg.mxu0
    %v358 = vrot.slane %v354, 6
    %v360 = vadd.f32 %v174, %v358
    %v361 = vmul.f32 %v360, 0.5
    %v362 = vtanh.pop %v361
    %v363 = vadd.f32 %v362, 1.0
    %v364 = vmul.f32 %v363, 0.5
    %v365 = vtanh.pop %v360
    %v367 = vrot.slane %v272, 6
    %v369 = vmul.f32 %v364, %v367
    %371 = vrot.lane.b32.xlu0 %v365, 64
    %v372 = vpop.permute.xlu0 %371
    %v374 = vmul.f32 %v364, %v372
    %376 = vrot.lane.b32.xlu0 %v374, 32
    %v377 = vpop.permute.xlu0 %376
    %v379 = vadd.f32 %v369, %v377
    %v380 = vtanh.pop %v379
    %382 = vrot.lane.b32.xlu0 %v380, 64
    %v383 = vpop.permute.xlu0 %382
    %v385 = vmul.f32 %v364, %v383
    %387 = vrot.lane.b32.xlu0 %v385, 32
    %v388 = vpop.permute.xlu0 %387
    %vm390 = vcmask 257026
    %391 = vst.msk [vmem:[#allocation2] sm:$0xc] %vm390, %v388
    %v392 = vrot.slane %v385, 2
    %393 = vrot.lane.b32.xlu0 %v392, 32
    %v394 = vpop.permute.xlu0 %393
    %v395 = vsel %vm182, %v394, 0
    %397 = vmatprep.subr.mxu0 0.0
    %398 = vmatpush1.msra.mxu0 0.0
    %399 = vmatprep.subr.mxu0 0.0
    %400 = vmatpush1.msra.mxu0 0.0
    %401 = vmatprep.subr.mxu0 0.0
    %402 = vmatpush1.msra.mxu0 0.0
    %403 = vmatprep.subr.mxu0 0.0
    %404 = vmatpush1.msra.mxu0 0.0
    %405 = vmatprep.subr.mxu0 0.0
    %406 = vmatpush1.msra.mxu0 0.0
    %407 = vmatprep.subr.mxu0 0.0
    %408 = vmatpush1.msra.mxu0 0.0
    %409 = vmatprep.subr.mxu0 0.0
    %410 = vmatpush1.msra.mxu0 0.0
    %411 = vmatprep.subr.mxu0 0.0
    %412 = vmatpush1.msra.mxu0 0.0
    %413 = vmatprep.subr.mxu0 0.0
    %414 = vmatpush1.msra.mxu0 0.0
    %415 = vmatprep.subr.mxu0 0.0
    %416 = vmatpush1.msra.mxu0 0.0
    %417 = vmatprep.subr.mxu0 0.0
    %418 = vmatpush1.msra.mxu0 0.0
    %419 = vmatprep.subr.mxu0 0.0
    %420 = vmatpush1.msra.mxu0 0.0
    %421 = vmatprep.subr.mxu0 0.0
    %422 = vmatpush1.msra.mxu0 %v86
    %423 = vmatprep.subr.mxu0 0.0
    %424 = vmatpush1.msra.mxu0 %v85
    %425 = vmatprep.subr.mxu0 0.0
    %426 = vmatpush1.msra.mxu0 %v84
    %427 = vmatprep.subr.mxu0 0.0
    %428 = vmatpush1.msra.mxu0 %v83
    %429 = vmatprep.subr.mxu0 0.0
    %430 = vmatpush2.msra.mxu0 0.0
    %431 = vmatprep.subr.mxu0 0.0
    %432 = vmatpush2.msra.mxu0 0.0
    %433 = vmatprep.subr.mxu0 0.0
    %434 = vmatpush2.msra.mxu0 0.0
    %435 = vmatprep.subr.mxu0 0.0
    %436 = vmatpush2.msra.mxu0 0.0
    %437 = vmatprep.subr.mxu0 0.0
    %438 = vmatpush2.msra.mxu0 0.0
    %439 = vmatprep.subr.mxu0 0.0
    %440 = vmatpush2.msra.mxu0 0.0
    %441 = vmatprep.subr.mxu0 0.0
    %442 = vmatpush2.msra.mxu0 0.0
    %443 = vmatprep.subr.mxu0 0.0
    %444 = vmatpush2.msra.mxu0 0.0
    %445 = vmatprep.subr.mxu0 0.0
    %446 = vmatpush2.msra.mxu0 0.0
    %447 = vmatprep.subr.mxu0 0.0
    %448 = vmatpush2.msra.mxu0 0.0
    %449 = vmatprep.subr.mxu0 0.0
    %450 = vmatpush2.msra.mxu0 0.0
    %451 = vmatprep.subr.mxu0 0.0
    %452 = vmatpush2.msra.mxu0 0.0
    %453 = vmatprep.subr.mxu0 0.0
    %454 = vmatpush2.msra.mxu0 0.0
    %455 = vmatprep.subr.mxu0 0.0
    %456 = vmatpush2.msra.mxu0 0.0
    %457 = vmatprep.subr.mxu0 0.0
    %458 = vmatpush2.msra.mxu0 0.0
    %459 = vmatprep.subr.mxu0 0.0
    %460 = vmatpush2.msra.mxu0 0.0
    %461 = vmatprep.mubr.f32.mxu0 0.0
    %462 = vmatmul.mubr.f32.gmra.mxu0 %v395
    %v463 = vpop.f32.mrf.mxu0
    %v464 = vadd.f32 0.0, %v463
    %v465 = vpop.f32.mrf.mxu0
    %466 = vdwg.mxu0
    %v468 = vrot.slane %v464, 4
    %v470 = vadd.f32 %v174, %v468
    %v471 = vmul.f32 %v470, 0.5
    %v472 = vtanh.pop %v471
    %v473 = vadd.f32 %v472, 1.0
    %v474 = vmul.f32 %v473, 0.5
    %v475 = vtanh.pop %v470
    %v477 = vrot.slane %v379, 6
    %v479 = vmul.f32 %v474, %v477
    %481 = vrot.lane.b32.xlu0 %v475, 64
    %v482 = vpop.permute.xlu0 %481
    %v484 = vmul.f32 %v474, %v482
    %486 = vrot.lane.b32.xlu0 %v484, 32
    %v487 = vpop.permute.xlu0 %486
    %v489 = vadd.f32 %v479, %v487
    %v490 = vtanh.pop %v489
    %492 = vrot.lane.b32.xlu0 %v490, 64
    %v493 = vpop.permute.xlu0 %492
    %v495 = vmul.f32 %v474, %v493
    %497 = vrot.lane.b32.xlu0 %v495, 32
    %v498 = vpop.permute.xlu0 %497
    %vm500 = vcmask 259076
    %501 = vst.msk [vmem:[#allocation2] sm:$0x30] %vm500, %v498
    %v502 = vrot.slane %v495, 4
    %503 = vrot.lane.b32.xlu0 %v502, 32
    %v504 = vpop.permute.xlu0 %503
    %v505 = vsel %vm182, %v504, 0
    %507 = vmatprep.subr.mxu0 0.0
    %508 = vmatpush1.msra.mxu0 0.0
    %509 = vmatprep.subr.mxu0 0.0
    %510 = vmatpush1.msra.mxu0 0.0
    %511 = vmatprep.subr.mxu0 0.0
    %512 = vmatpush1.msra.mxu0 0.0
    %513 = vmatprep.subr.mxu0 0.0
    %514 = vmatpush1.msra.mxu0 0.0
    %515 = vmatprep.subr.mxu0 0.0
    %516 = vmatpush1.msra.mxu0 0.0
    %517 = vmatprep.subr.mxu0 0.0
    %518 = vmatpush1.msra.mxu0 0.0
    %519 = vmatprep.subr.mxu0 0.0
    %520 = vmatpush1.msra.mxu0 0.0
    %521 = vmatprep.subr.mxu0 0.0
    %522 = vmatpush1.msra.mxu0 0.0
    %523 = vmatprep.subr.mxu0 0.0
    %524 = vmatpush1.msra.mxu0 0.0
    %525 = vmatprep.subr.mxu0 0.0
    %526 = vmatpush1.msra.mxu0 0.0
    %527 = vmatprep.subr.mxu0 0.0
    %528 = vmatpush1.msra.mxu0 0.0
    %529 = vmatprep.subr.mxu0 0.0
    %530 = vmatpush1.msra.mxu0 0.0
    %531 = vmatprep.subr.mxu0 0.0
    %532 = vmatpush1.msra.mxu0 %v86
    %533 = vmatprep.subr.mxu0 0.0
    %534 = vmatpush1.msra.mxu0 %v85
    %535 = vmatprep.subr.mxu0 0.0
    %536 = vmatpush1.msra.mxu0 %v84
    %537 = vmatprep.subr.mxu0 0.0
    %538 = vmatpush1.msra.mxu0 %v83
    %539 = vmatprep.subr.mxu0 0.0
    %540 = vmatpush2.msra.mxu0 0.0
    %541 = vmatprep.subr.mxu0 0.0
    %542 = vmatpush2.msra.mxu0 0.0
    %543 = vmatprep.subr.mxu0 0.0
    %544 = vmatpush2.msra.mxu0 0.0
    %545 = vmatprep.subr.mxu0 0.0
    %546 = vmatpush2.msra.mxu0 0.0
    %547 = vmatprep.subr.mxu0 0.0
    %548 = vmatpush2.msra.mxu0 0.0
    %549 = vmatprep.subr.mxu0 0.0
    %550 = vmatpush2.msra.mxu0 0.0
    %551 = vmatprep.subr.mxu0 0.0
    %552 = vmatpush2.msra.mxu0 0.0
    %553 = vmatprep.subr.mxu0 0.0
    %554 = vmatpush2.msra.mxu0 0.0
    %555 = vmatprep.subr.mxu0 0.0
    %556 = vmatpush2.msra.mxu0 0.0
    %557 = vmatprep.subr.mxu0 0.0
    %558 = vmatpush2.msra.mxu0 0.0
    %559 = vmatprep.subr.mxu0 0.0
    %560 = vmatpush2.msra.mxu0 0.0
    %561 = vmatprep.subr.mxu0 0.0
    %562 = vmatpush2.msra.mxu0 0.0
    %563 = vmatprep.subr.mxu0 0.0
    %564 = vmatpush2.msra.mxu0 0.0
    %565 = vmatprep.subr.mxu0 0.0
    %566 = vmatpush2.msra.mxu0 0.0
    %567 = vmatprep.subr.mxu0 0.0
    %568 = vmatpush2.msra.mxu0 0.0
    %569 = vmatprep.subr.mxu0 0.0
    %570 = vmatpush2.msra.mxu0 0.0
    %571 = vmatprep.mubr.f32.mxu0 0.0
    %572 = vmatmul.mubr.f32.gmra.mxu0 %v505
    %v573 = vpop.f32.mrf.mxu0
    %v574 = vadd.f32 0.0, %v573
    %v575 = vpop.f32.mrf.mxu0
    %576 = vdwg.mxu0
    %v578 = vrot.slane %v574, 2
    %v580 = vadd.f32 %v174, %v578
    %v581 = vmul.f32 %v580, 0.5
    %v582 = vtanh.pop %v581
    %v583 = vadd.f32 %v582, 1.0
    %v584 = vmul.f32 %v583, 0.5
    %v585 = vtanh.pop %v580
    %v587 = vrot.slane %v489, 6
    %v589 = vmul.f32 %v584, %v587
    %591 = vrot.lane.b32.xlu0 %v585, 64
    %v592 = vpop.permute.xlu0 %591
    %v594 = vmul.f32 %v584, %v592
    %596 = vrot.lane.b32.xlu0 %v594, 32
    %v597 = vpop.permute.xlu0 %596
    %v599 = vadd.f32 %v589, %v597
    %v600 = vtanh.pop %v599
    %602 = vrot.lane.b32.xlu0 %v600, 64
    %v603 = vpop.permute.xlu0 %602
    %v605 = vmul.f32 %v584, %v603
    %607 = vrot.lane.b32.xlu0 %v605, 32
    %v608 = vpop.permute.xlu0 %607
    %vm610 = vcmask 261126
    %611 = vst.msk [vmem:[#allocation2] sm:$0xc0] %vm610, %v608
    %v612 = vrot.slane %v605, 6
    %613 = vrot.lane.b32.xlu0 %v612, 32
    %v614 = vpop.permute.xlu0 %613
    %v615 = vsel %vm182, %v614, 0
    %617 = vmatprep.subr.mxu0 0.0
    %618 = vmatpush1.msra.mxu0 0.0
    %619 = vmatprep.subr.mxu0 0.0
    %620 = vmatpush1.msra.mxu0 0.0
    %621 = vmatprep.subr.mxu0 0.0
    %622 = vmatpush1.msra.mxu0 0.0
    %623 = vmatprep.subr.mxu0 0.0
    %624 = vmatpush1.msra.mxu0 0.0
    %625 = vmatprep.subr.mxu0 0.0
    %626 = vmatpush1.msra.mxu0 0.0
    %627 = vmatprep.subr.mxu0 0.0
    %628 = vmatpush1.msra.mxu0 0.0
    %629 = vmatprep.subr.mxu0 0.0
    %630 = vmatpush1.msra.mxu0 0.0
    %631 = vmatprep.subr.mxu0 0.0
    %632 = vmatpush1.msra.mxu0 0.0
    %633 = vmatprep.subr.mxu0 0.0
    %634 = vmatpush1.msra.mxu0 0.0
    %635 = vmatprep.subr.mxu0 0.0
    %636 = vmatpush1.msra.mxu0 0.0
    %637 = vmatprep.subr.mxu0 0.0
    %638 = vmatpush1.msra.mxu0 0.0
    %639 = vmatprep.subr.mxu0 0.0
    %640 = vmatpush1.msra.mxu0 0.0
    %641 = vmatprep.subr.mxu0 0.0
    %642 = vmatpush1.msra.mxu0 %v86
    %643 = vmatprep.subr.mxu0 0.0
    %644 = vmatpush1.msra.mxu0 %v85
    %645 = vmatprep.subr.mxu0 0.0
    %646 = vmatpush1.msra.mxu0 %v84
    %647 = vmatprep.subr.mxu0 0.0
    %648 = vmatpush1.msra.mxu0 %v83
    %649 = vmatprep.subr.mxu0 0.0
    %650 = vmatpush2.msra.mxu0 0.0
    %651 = vmatprep.subr.mxu0 0.0
    %652 = vmatpush2.msra.mxu0 0.0
    %653 = vmatprep.subr.mxu0 0.0
    %654 = vmatpush2.msra.mxu0 0.0
    %655 = vmatprep.subr.mxu0 0.0
    %656 = vmatpush2.msra.mxu0 0.0
    %657 = vmatprep.subr.mxu0 0.0
    %658 = vmatpush2.msra.mxu0 0.0
    %659 = vmatprep.subr.mxu0 0.0
    %660 = vmatpush2.msra.mxu0 0.0
    %661 = vmatprep.subr.mxu0 0.0
    %662 = vmatpush2.msra.mxu0 0.0
    %663 = vmatprep.subr.mxu0 0.0
    %664 = vmatpush2.msra.mxu0 0.0
    %665 = vmatprep.subr.mxu0 0.0
    %666 = vmatpush2.msra.mxu0 0.0
    %667 = vmatprep.subr.mxu0 0.0
    %668 = vmatpush2.msra.mxu0 0.0
    %669 = vmatprep.subr.mxu0 0.0
    %670 = vmatpush2.msra.mxu0 0.0
    %671 = vmatprep.subr.mxu0 0.0
    %672 = vmatpush2.msra.mxu0 0.0
    %673 = vmatprep.subr.mxu0 0.0
    %674 = vmatpush2.msra.mxu0 0.0
    %675 = vmatprep.subr.mxu0 0.0
    %676 = vmatpush2.msra.mxu0 0.0
    %677 = vmatprep.subr.mxu0 0.0
    %678 = vmatpush2.msra.mxu0 0.0
    %679 = vmatprep.subr.mxu0 0.0
    %680 = vmatpush2.msra.mxu0 0.0
    %681 = vmatprep.mubr.f32.mxu0 0.0
    %682 = vmatmul.mubr.f32.gmra.mxu0 %v615
    %v683 = vpop.f32.mrf.mxu0
    %v684 = vadd.f32 0.0, %v683
    %v685 = vpop.f32.mrf.mxu0
    %686 = vdwg.mxu0
    %v687 = vadd.f32 %v179, %v684
    %v688 = vmul.f32 %v687, 0.5
    %v689 = vtanh.pop %v688
    %v690 = vadd.f32 %v689, 1.0
    %v691 = vmul.f32 %v690, 0.5
    %v692 = vtanh.pop %v687
    %v694 = vrot.slane %v599, 6
    %v696 = vmul.f32 %v691, %v694
    %698 = vrot.lane.b32.xlu0 %v692, 64
    %v699 = vpop.permute.xlu0 %698
    %v701 = vmul.f32 %v691, %v699
    %703 = vrot.lane.b32.xlu0 %v701, 32
    %v704 = vpop.permute.xlu0 %703
    %v706 = vadd.f32 %v696, %v704
    %v707 = vtanh.pop %v706
    %709 = vrot.lane.b32.xlu0 %v707, 64
    %v710 = vpop.permute.xlu0 %709
    %v712 = vmul.f32 %v691, %v710
    %714 = vrot.lane.b32.xlu0 %v712, 32
    %v715 = vpop.permute.xlu0 %714
    %717 = vst.msk [vmem:[#allocation2 + $0x8] sm:$0x3] %vm283, %v715
    %v718 = vsel %vm182, %v715, 0
    %720 = vmatprep.subr.mxu0 0.0
    %721 = vmatpush1.msra.mxu0 0.0
    %722 = vmatprep.subr.mxu0 0.0
    %723 = vmatpush1.msra.mxu0 0.0
    %724 = vmatprep.subr.mxu0 0.0
    %725 = vmatpush1.msra.mxu0 0.0
    %726 = vmatprep.subr.mxu0 0.0
    %727 = vmatpush1.msra.mxu0 0.0
    %728 = vmatprep.subr.mxu0 0.0
    %729 = vmatpush1.msra.mxu0 0.0
    %730 = vmatprep.subr.mxu0 0.0
    %731 = vmatpush1.msra.mxu0 0.0
    %732 = vmatprep.subr.mxu0 0.0
    %733 = vmatpush1.msra.mxu0 0.0
    %734 = vmatprep.subr.mxu0 0.0
    %735 = vmatpush1.msra.mxu0 0.0
    %736 = vmatprep.subr.mxu0 0.0
    %737 = vmatpush1.msra.mxu0 0.0
    %738 = vmatprep.subr.mxu0 0.0
    %739 = vmatpush1.msra.mxu0 0.0
    %740 = vmatprep.subr.mxu0 0.0
    %741 = vmatpush1.msra.mxu0 0.0
    %742 = vmatprep.subr.mxu0 0.0
    %743 = vmatpush1.msra.mxu0 0.0
    %744 = vmatprep.subr.mxu0 0.0
    %745 = vmatpush1.msra.mxu0 %v86
    %746 = vmatprep.subr.mxu0 0.0
    %747 = vmatpush1.msra.mxu0 %v85
    %748 = vmatprep.subr.mxu0 0.0
    %749 = vmatpush1.msra.mxu0 %v84
    %750 = vmatprep.subr.mxu0 0.0
    %751 = vmatpush1.msra.mxu0 %v83
    %752 = vmatprep.subr.mxu0 0.0
    %753 = vmatpush2.msra.mxu0 0.0
    %754 = vmatprep.subr.mxu0 0.0
    %755 = vmatpush2.msra.mxu0 0.0
    %756 = vmatprep.subr.mxu0 0.0
    %757 = vmatpush2.msra.mxu0 0.0
    %758 = vmatprep.subr.mxu0 0.0
    %759 = vmatpush2.msra.mxu0 0.0
    %760 = vmatprep.subr.mxu0 0.0
    %761 = vmatpush2.msra.mxu0 0.0
    %762 = vmatprep.subr.mxu0 0.0
    %763 = vmatpush2.msra.mxu0 0.0
    %764 = vmatprep.subr.mxu0 0.0
    %765 = vmatpush2.msra.mxu0 0.0
    %766 = vmatprep.subr.mxu0 0.0
    %767 = vmatpush2.msra.mxu0 0.0
    %768 = vmatprep.subr.mxu0 0.0
    %769 = vmatpush2.msra.mxu0 0.0
    %770 = vmatprep.subr.mxu0 0.0
    %771 = vmatpush2.msra.mxu0 0.0
    %772 = vmatprep.subr.mxu0 0.0
    %773 = vmatpush2.msra.mxu0 0.0
    %774 = vmatprep.subr.mxu0 0.0
    %775 = vmatpush2.msra.mxu0 0.0
    %776 = vmatprep.subr.mxu0 0.0
    %777 = vmatpush2.msra.mxu0 0.0
    %778 = vmatprep.subr.mxu0 0.0
    %779 = vmatpush2.msra.mxu0 0.0
    %780 = vmatprep.subr.mxu0 0.0
    %781 = vmatpush2.msra.mxu0 0.0
    %782 = vmatprep.subr.mxu0 0.0
    %783 = vmatpush2.msra.mxu0 0.0
    %784 = vmatprep.mubr.f32.mxu0 0.0
    %785 = vmatmul.mubr.f32.gmra.mxu0 %v718
    %v786 = vpop.f32.mrf.mxu0
    %v787 = vadd.f32 0.0, %v786
    %v788 = vpop.f32.mrf.mxu0
    %789 = vdwg.mxu0
    %v791 = vrot.slane %v787, 6
    %v793 = vadd.f32 %v179, %v791
    %v794 = vmul.f32 %v793, 0.5
    %v795 = vtanh.pop %v794
    %v796 = vadd.f32 %v795, 1.0
    %v797 = vmul.f32 %v796, 0.5
    %v798 = vtanh.pop %v793
    %v800 = vrot.slane %v706, 6
    %v802 = vmul.f32 %v797, %v800
    %804 = vrot.lane.b32.xlu0 %v798, 64
    %v805 = vpop.permute.xlu0 %804
    %v807 = vmul.f32 %v797, %v805
    %809 = vrot.lane.b32.xlu0 %v807, 32
    %v810 = vpop.permute.xlu0 %809
    %v812 = vadd.f32 %v802, %v810
    %v813 = vtanh.pop %v812
    %815 = vrot.lane.b32.xlu0 %v813, 64
    %v816 = vpop.permute.xlu0 %815
    %v818 = vmul.f32 %v797, %v816
    %820 = vrot.lane.b32.xlu0 %v818, 32
    %v821 = vpop.permute.xlu0 %820
    %823 = vst.msk [vmem:[#allocation2 + $0x8] sm:$0xc] %vm390, %v821
    %v824 = vrot.slane %v818, 2
    %825 = vrot.lane.b32.xlu0 %v824, 32
    %v826 = vpop.permute.xlu0 %825
    %v827 = vsel %vm182, %v826, 0
    %829 = vmatprep.subr.mxu0 0.0
    %830 = vmatpush1.msra.mxu0 0.0
    %831 = vmatprep.subr.mxu0 0.0
    %832 = vmatpush1.msra.mxu0 0.0
    %833 = vmatprep.subr.mxu0 0.0
    %834 = vmatpush1.msra.mxu0 0.0
    %835 = vmatprep.subr.mxu0 0.0
    %836 = vmatpush1.msra.mxu0 0.0
    %837 = vmatprep.subr.mxu0 0.0
    %838 = vmatpush1.msra.mxu0 0.0
    %839 = vmatprep.subr.mxu0 0.0
    %840 = vmatpush1.msra.mxu0 0.0
    %841 = vmatprep.subr.mxu0 0.0
    %842 = vmatpush1.msra.mxu0 0.0
    %843 = vmatprep.subr.mxu0 0.0
    %844 = vmatpush1.msra.mxu0 0.0
    %845 = vmatprep.subr.mxu0 0.0
    %846 = vmatpush1.msra.mxu0 0.0
    %847 = vmatprep.subr.mxu0 0.0
    %848 = vmatpush1.msra.mxu0 0.0
    %849 = vmatprep.subr.mxu0 0.0
    %850 = vmatpush1.msra.mxu0 0.0
    %851 = vmatprep.subr.mxu0 0.0
    %852 = vmatpush1.msra.mxu0 0.0
    %853 = vmatprep.subr.mxu0 0.0
    %854 = vmatpush1.msra.mxu0 %v86
    %855 = vmatprep.subr.mxu0 0.0
    %856 = vmatpush1.msra.mxu0 %v85
    %857 = vmatprep.subr.mxu0 0.0
    %858 = vmatpush1.msra.mxu0 %v84
    %859 = vmatprep.subr.mxu0 0.0
    %860 = vmatpush1.msra.mxu0 %v83
    %861 = vmatprep.subr.mxu0 0.0
    %862 = vmatpush2.msra.mxu0 0.0
    %863 = vmatprep.subr.mxu0 0.0
    %864 = vmatpush2.msra.mxu0 0.0
    %865 = vmatprep.subr.mxu0 0.0
    %866 = vmatpush2.msra.mxu0 0.0
    %867 = vmatprep.subr.mxu0 0.0
    %868 = vmatpush2.msra.mxu0 0.0
    %869 = vmatprep.subr.mxu0 0.0
    %870 = vmatpush2.msra.mxu0 0.0
    %871 = vmatprep.subr.mxu0 0.0
    %872 = vmatpush2.msra.mxu0 0.0
    %873 = vmatprep.subr.mxu0 0.0
    %874 = vmatpush2.msra.mxu0 0.0
    %875 = vmatprep.subr.mxu0 0.0
    %876 = vmatpush2.msra.mxu0 0.0
    %877 = vmatprep.subr.mxu0 0.0
    %878 = vmatpush2.msra.mxu0 0.0
    %879 = vmatprep.subr.mxu0 0.0
    %880 = vmatpush2.msra.mxu0 0.0
    %881 = vmatprep.subr.mxu0 0.0
    %882 = vmatpush2.msra.mxu0 0.0
    %883 = vmatprep.subr.mxu0 0.0
    %884 = vmatpush2.msra.mxu0 0.0
    %885 = vmatprep.subr.mxu0 0.0
    %886 = vmatpush2.msra.mxu0 0.0
    %887 = vmatprep.subr.mxu0 0.0
    %888 = vmatpush2.msra.mxu0 0.0
    %889 = vmatprep.subr.mxu0 0.0
    %890 = vmatpush2.msra.mxu0 0.0
    %891 = vmatprep.subr.mxu0 0.0
    %892 = vmatpush2.msra.mxu0 0.0
    %893 = vmatprep.mubr.f32.mxu0 0.0
    %894 = vmatmul.mubr.f32.gmra.mxu0 %v827
    %v895 = vpop.f32.mrf.mxu0
    %v896 = vadd.f32 0.0, %v895
    %v897 = vpop.f32.mrf.mxu0
    %898 = vdwg.mxu0
    %v900 = vrot.slane %v896, 4
    %v902 = vadd.f32 %v179, %v900
    %v903 = vmul.f32 %v902, 0.5
    %v904 = vtanh.pop %v903
    %v905 = vadd.f32 %v904, 1.0
    %v906 = vmul.f32 %v905, 0.5
    %v907 = vtanh.pop %v902
    %v909 = vrot.slane %v812, 6
    %v911 = vmul.f32 %v906, %v909
    %913 = vrot.lane.b32.xlu0 %v907, 64
    %v914 = vpop.permute.xlu0 %913
    %v916 = vmul.f32 %v906, %v914
    %918 = vrot.lane.b32.xlu0 %v916, 32
    %v919 = vpop.permute.xlu0 %918
    %v921 = vadd.f32 %v911, %v919
    %v922 = vtanh.pop %v921
    %924 = vrot.lane.b32.xlu0 %v922, 64
    %v925 = vpop.permute.xlu0 %924
    %v927 = vmul.f32 %v906, %v925
    %929 = vrot.lane.b32.xlu0 %v927, 32
    %v930 = vpop.permute.xlu0 %929
    %932 = vst.msk [vmem:[#allocation2 + $0x8] sm:$0x30] %vm500, %v930
    %v933 = vrot.slane %v927, 4
    %934 = vrot.lane.b32.xlu0 %v933, 32
    %v935 = vpop.permute.xlu0 %934
    %v936 = vsel %vm182, %v935, 0
    %938 = vmatprep.subr.mxu0 0.0
    %939 = vmatpush1.msra.mxu0 0.0
    %940 = vmatprep.subr.mxu0 0.0
    %941 = vmatpush1.msra.mxu0 0.0
    %942 = vmatprep.subr.mxu0 0.0
    %943 = vmatpush1.msra.mxu0 0.0
    %944 = vmatprep.subr.mxu0 0.0
    %945 = vmatpush1.msra.mxu0 0.0
    %946 = vmatprep.subr.mxu0 0.0
    %947 = vmatpush1.msra.mxu0 0.0
    %948 = vmatprep.subr.mxu0 0.0
    %949 = vmatpush1.msra.mxu0 0.0
    %950 = vmatprep.subr.mxu0 0.0
    %951 = vmatpush1.msra.mxu0 0.0
    %952 = vmatprep.subr.mxu0 0.0
    %953 = vmatpush1.msra.mxu0 0.0
    %954 = vmatprep.subr.mxu0 0.0
    %955 = vmatpush1.msra.mxu0 0.0
    %956 = vmatprep.subr.mxu0 0.0
    %957 = vmatpush1.msra.mxu0 0.0
    %958 = vmatprep.subr.mxu0 0.0
    %959 = vmatpush1.msra.mxu0 0.0
    %960 = vmatprep.subr.mxu0 0.0
    %961 = vmatpush1.msra.mxu0 0.0
    %962 = vmatprep.subr.mxu0 0.0
    %963 = vmatpush1.msra.mxu0 %v86
    %964 = vmatprep.subr.mxu0 0.0
    %965 = vmatpush1.msra.mxu0 %v85
    %966 = vmatprep.subr.mxu0 0.0
    %967 = vmatpush1.msra.mxu0 %v84
    %968 = vmatprep.subr.mxu0 0.0
    %969 = vmatpush1.msra.mxu0 %v83
    %970 = vmatprep.subr.mxu0 0.0
    %971 = vmatpush2.msra.mxu0 0.0
    %972 = vmatprep.subr.mxu0 0.0
    %973 = vmatpush2.msra.mxu0 0.0
    %974 = vmatprep.subr.mxu0 0.0
    %975 = vmatpush2.msra.mxu0 0.0
    %976 = vmatprep.subr.mxu0 0.0
    %977 = vmatpush2.msra.mxu0 0.0
    %978 = vmatprep.subr.mxu0 0.0
    %979 = vmatpush2.msra.mxu0 0.0
    %980 = vmatprep.subr.mxu0 0.0
    %981 = vmatpush2.msra.mxu0 0.0
    %982 = vmatprep.subr.mxu0 0.0
    %983 = vmatpush2.msra.mxu0 0.0
    %984 = vmatprep.subr.mxu0 0.0
    %985 = vmatpush2.msra.mxu0 0.0
    %986 = vmatprep.subr.mxu0 0.0
    %987 = vmatpush2.msra.mxu0 0.0
    %988 = vmatprep.subr.mxu0 0.0
    %989 = vmatpush2.msra.mxu0 0.0
    %990 = vmatprep.subr.mxu0 0.0
    %991 = vmatpush2.msra.mxu0 0.0
    %992 = vmatprep.subr.mxu0 0.0
    %993 = vmatpush2.msra.mxu0 0.0
    %994 = vmatprep.subr.mxu0 0.0
    %995 = vmatpush2.msra.mxu0 0.0
    %996 = vmatprep.subr.mxu0 0.0
    %997 = vmatpush2.msra.mxu0 0.0
    %998 = vmatprep.subr.mxu0 0.0
    %999 = vmatpush2.msra.mxu0 0.0
    %1000 = vmatprep.subr.mxu0 0.0
    %1001 = vmatpush2.msra.mxu0 0.0
    %1002 = vmatprep.mubr.f32.mxu0 0.0
    %1003 = vmatmul.mubr.f32.gmra.mxu0 %v936
    %v1004 = vpop.f32.mrf.mxu0
    %v1005 = vadd.f32 0.0, %v1004
    %v1006 = vpop.f32.mrf.mxu0
    %1007 = vdwg.mxu0
    %v1009 = vrot.slane %v1005, 2
    %v1011 = vadd.f32 %v179, %v1009
    %v1012 = vmul.f32 %v1011, 0.5
    %v1013 = vtanh.pop %v1012
    %v1014 = vadd.f32 %v1013, 1.0
    %v1015 = vmul.f32 %v1014, 0.5
    %v1016 = vtanh.pop %v1011
    %v1018 = vrot.slane %v921, 6
    %v1020 = vmul.f32 %v1015, %v1018
    %1022 = vrot.lane.b32.xlu0 %v1016, 64
    %v1023 = vpop.permute.xlu0 %1022
    %v1025 = vmul.f32 %v1015, %v1023
    %1027 = vrot.lane.b32.xlu0 %v1025, 32
    %v1028 = vpop.permute.xlu0 %1027
    %v1030 = vadd.f32 %v1020, %v1028
    %v1031 = vtanh.pop %v1030
    %1033 = vrot.lane.b32.xlu0 %v1031, 64
    %v1034 = vpop.permute.xlu0 %1033
    %v1036 = vmul.f32 %v1015, %v1034
    %1038 = vrot.lane.b32.xlu0 %v1036, 32
    %v1039 = vpop.permute.xlu0 %1038
    %1041 = vst.msk [vmem:[#allocation2 + $0x8] sm:$0xc0] %vm610, %v1039
    %v1042 = vld [vmem:[#allocation8] sm:$0xff]
    %v1043 = vld [vmem:[#allocation8 + $0x8] sm:$0xff]
    %v1044 = vld [vmem:[#allocation8 + $0x10] sm:$0xff]
    %v1045 = vld [vmem:[#allocation8 + $0x18] sm:$0xff]
    %v1046 = vld [vmem:[%s5] sm:$0xff]
    %v1047 = vld [vmem:[%s5 + $0x8] sm:$0xff]
    %v1048 = vld [vmem:[%s5 + $0x10] sm:$0xff]
    %v1049 = vld [vmem:[%s5 + $0x18] sm:$0xff]
    %v1050 = vld [vmem:[#allocation9] sm:$0x1]
    %v1051 = vld [vmem:[#allocation2] sm:$0xff]
    %v1052 = vld [vmem:[#allocation2 + $0x8] sm:$0xff]
    %v1054 = vlaneseq
    %v1055 = vshrl.u32 %v1054, 7
    %v1056 = vsub.s32 0, %v1055
    %v1057 = vrot.slane %v1050, %v1056
    %v1060 = vsel %vm182, %v1051, 0
    %v1063 = vsel %vm182, %v1052, 0
    %1065 = vmatprep.subr.mxu0 0.0
    %1066 = vmatpush1.msra.mxu0 0.0
    %1067 = vmatprep.subr.mxu0 0.0
    %1068 = vmatpush1.msra.mxu0 0.0
    %1069 = vmatprep.subr.mxu0 0.0
    %1070 = vmatpush1.msra.mxu0 0.0
    %1071 = vmatprep.subr.mxu0 0.0
    %1072 = vmatpush1.msra.mxu0 0.0
    %1073 = vmatprep.subr.mxu0 0.0
    %1074 = vmatpush1.msra.mxu0 0.0
    %1075 = vmatprep.subr.mxu0 0.0
    %1076 = vmatpush1.msra.mxu0 0.0
    %1077 = vmatprep.subr.mxu0 0.0
    %1078 = vmatpush1.msra.mxu0 0.0
    %1079 = vmatprep.subr.mxu0 0.0
    %1080 = vmatpush1.msra.mxu0 0.0
    %1081 = vmatprep.subr.mxu0 0.0
    %1082 = vmatpush1.msra.mxu0 0.0
    %1083 = vmatprep.subr.mxu0 0.0
    %1084 = vmatpush1.msra.mxu0 0.0
    %1085 = vmatprep.subr.mxu0 0.0
    %1086 = vmatpush1.msra.mxu0 0.0
    %1087 = vmatprep.subr.mxu0 0.0
    %1088 = vmatpush1.msra.mxu0 0.0
    %1089 = vmatprep.subr.mxu0 0.0
    %1090 = vmatpush1.msra.mxu0 %v1045
    %1091 = vmatprep.subr.mxu0 0.0
    %1092 = vmatpush1.msra.mxu0 %v1044
    %1093 = vmatprep.subr.mxu0 0.0
    %1094 = vmatpush1.msra.mxu0 %v1043
    %1095 = vmatprep.subr.mxu0 0.0
    %1096 = vmatpush1.msra.mxu0 %v1042
    %1097 = vmatprep.subr.mxu0 0.0
    %1098 = vmatpush2.msra.mxu0 0.0
    %1099 = vmatprep.subr.mxu0 0.0
    %1100 = vmatpush2.msra.mxu0 0.0
    %1101 = vmatprep.subr.mxu0 0.0
    %1102 = vmatpush2.msra.mxu0 0.0
    %1103 = vmatprep.subr.mxu0 0.0
    %1104 = vmatpush2.msra.mxu0 0.0
    %1105 = vmatprep.subr.mxu0 0.0
    %1106 = vmatpush2.msra.mxu0 0.0
    %1107 = vmatprep.subr.mxu0 0.0
    %1108 = vmatpush2.msra.mxu0 0.0
    %1109 = vmatprep.subr.mxu0 0.0
    %1110 = vmatpush2.msra.mxu0 0.0
    %1111 = vmatprep.subr.mxu0 0.0
    %1112 = vmatpush2.msra.mxu0 0.0
    %1113 = vmatprep.subr.mxu0 0.0
    %1114 = vmatpush2.msra.mxu0 0.0
    %1115 = vmatprep.subr.mxu0 0.0
    %1116 = vmatpush2.msra.mxu0 0.0
    %1117 = vmatprep.subr.mxu0 0.0
    %1118 = vmatpush2.msra.mxu0 0.0
    %1119 = vmatprep.subr.mxu0 0.0
    %1120 = vmatpush2.msra.mxu0 0.0
    %1121 = vmatprep.subr.mxu0 0.0
    %1122 = vmatpush2.msra.mxu0 0.0
    %1123 = vmatprep.subr.mxu0 0.0
    %1124 = vmatpush2.msra.mxu0 0.0
    %1125 = vmatprep.subr.mxu0 0.0
    %1126 = vmatpush2.msra.mxu0 0.0
    %1127 = vmatprep.subr.mxu0 0.0
    %1128 = vmatpush2.msra.mxu0 0.0
    %1129 = vmatprep.mubr.f32.mxu0 0.0
    %1130 = vmatmul.mubr.f32.gmra.mxu0 %v1060
    %v1131 = vpop.f32.mrf.mxu0
    %v1132 = vadd.f32 %v1057, %v1131
    %v1133 = vpop.f32.mrf.mxu0
    %1134 = vmatprep.mubr.f32.mxu0 0.0
    %1135 = vmatmul.mubr.f32.gmra.mxu0 %v1063
    %v1136 = vpop.f32.mrf.mxu0
    %v1137 = vadd.f32 %v1057, %v1136
    %v1138 = vpop.f32.mrf.mxu0
    %1139 = vdwg.mxu0
    %1140 = vmatprep.subr.mxu0 0.0
    %1141 = vmatpush1.msra.mxu0 0.0
    %1142 = vmatprep.subr.mxu0 0.0
    %1143 = vmatpush1.msra.mxu0 0.0
    %1144 = vmatprep.subr.mxu0 0.0
    %1145 = vmatpush1.msra.mxu0 0.0
    %1146 = vmatprep.subr.mxu0 0.0
    %1147 = vmatpush1.msra.mxu0 0.0
    %1148 = vmatprep.subr.mxu0 0.0
    %1149 = vmatpush1.msra.mxu0 0.0
    %1150 = vmatprep.subr.mxu0 0.0
    %1151 = vmatpush1.msra.mxu0 0.0
    %1152 = vmatprep.subr.mxu0 0.0
    %1153 = vmatpush1.msra.mxu0 0.0
    %1154 = vmatprep.subr.mxu0 0.0
    %1155 = vmatpush1.msra.mxu0 0.0
    %1156 = vmatprep.subr.mxu0 0.0
    %1157 = vmatpush1.msra.mxu0 0.0
    %1158 = vmatprep.subr.mxu0 0.0
    %1159 = vmatpush1.msra.mxu0 0.0
    %1160 = vmatprep.subr.mxu0 0.0
    %1161 = vmatpush1.msra.mxu0 0.0
    %1162 = vmatprep.subr.mxu0 0.0
    %1163 = vmatpush1.msra.mxu0 0.0
    %1164 = vmatprep.subr.mxu0 0.0
    %1165 = vmatpush1.msra.mxu0 %v1049
    %1166 = vmatprep.subr.mxu0 0.0
    %1167 = vmatpush1.msra.mxu0 %v1048
    %1168 = vmatprep.subr.mxu0 0.0
    %1169 = vmatpush1.msra.mxu0 %v1047
    %1170 = vmatprep.subr.mxu0 0.0
    %1171 = vmatpush1.msra.mxu0 %v1046
    %1172 = vmatprep.subr.mxu0 0.0
    %1173 = vmatpush2.msra.mxu0 0.0
    %1174 = vmatprep.subr.mxu0 0.0
    %1175 = vmatpush2.msra.mxu0 0.0
    %1176 = vmatprep.subr.mxu0 0.0
    %1177 = vmatpush2.msra.mxu0 0.0
    %1178 = vmatprep.subr.mxu0 0.0
    %1179 = vmatpush2.msra.mxu0 0.0
    %1180 = vmatprep.subr.mxu0 0.0
    %1181 = vmatpush2.msra.mxu0 0.0
    %1182 = vmatprep.subr.mxu0 0.0
    %1183 = vmatpush2.msra.mxu0 0.0
    %1184 = vmatprep.subr.mxu0 0.0
    %1185 = vmatpush2.msra.mxu0 0.0
    %1186 = vmatprep.subr.mxu0 0.0
    %1187 = vmatpush2.msra.mxu0 0.0
    %1188 = vmatprep.subr.mxu0 0.0
    %1189 = vmatpush2.msra.mxu0 0.0
    %1190 = vmatprep.subr.mxu0 0.0
    %1191 = vmatpush2.msra.mxu0 0.0
    %1192 = vmatprep.subr.mxu0 0.0
    %1193 = vmatpush2.msra.mxu0 0.0
    %1194 = vmatprep.subr.mxu0 0.0
    %1195 = vmatpush2.msra.mxu0 0.0
    %1196 = vmatprep.subr.mxu0 0.0
    %1197 = vmatpush2.msra.mxu0 0.0
    %1198 = vmatprep.subr.mxu0 0.0
    %1199 = vmatpush2.msra.mxu0 0.0
    %1200 = vmatprep.subr.mxu0 0.0
    %1201 = vmatpush2.msra.mxu0 0.0
    %1202 = vmatprep.subr.mxu0 0.0
    %1203 = vmatpush2.msra.mxu0 0.0
    %1204 = vmatprep.mubr.f32.mxu0 0.0
    %1205 = vmatmul.mubr.f32.gmra.mxu0 %v184
    %v1206 = vpop.f32.mrf.mxu0
    %v1207 = vadd.f32 0.0, %v1206
    %v1208 = vpop.f32.mrf.mxu0
    %1209 = vdwg.mxu0
    %v1210 = vadd.f32 %v1132, %v1207
    %v1211 = vmul.f32 %v1210, 0.5
    %v1212 = vtanh.pop %v1211
    %v1213 = vadd.f32 %v1212, 1.0
    %v1214 = vmul.f32 %v1213, 0.5
    %v1215 = vtanh.pop %v1210
    %v1216 = vmul.f32 %v1214, 0.0
    %1218 = vrot.lane.b32.xlu0 %v1215, 64
    %v1219 = vpop.permute.xlu0 %1218
    %v1221 = vmul.f32 %v1214, %v1219
    %1223 = vrot.lane.b32.xlu0 %v1221, 32
    %v1224 = vpop.permute.xlu0 %1223
    %v1226 = vadd.f32 %v1216, %v1224
    %v1227 = vtanh.pop %v1226
    %1229 = vrot.lane.b32.xlu0 %v1227, 64
    %v1230 = vpop.permute.xlu0 %1229
    %v1232 = vmul.f32 %v1214, %v1230
    %1234 = vrot.lane.b32.xlu0 %v1232, 32
    %v1235 = vpop.permute.xlu0 %1234
    %v1236 = vsel %vm182, %v1235, 0
    %1238 = vmatprep.subr.mxu0 0.0
    %1239 = vmatpush1.msra.mxu0 0.0
    %1240 = vmatprep.subr.mxu0 0.0
    %1241 = vmatpush1.msra.mxu0 0.0
    %1242 = vmatprep.subr.mxu0 0.0
    %1243 = vmatpush1.msra.mxu0 0.0
    %1244 = vmatprep.subr.mxu0 0.0
    %1245 = vmatpush1.msra.mxu0 0.0
    %1246 = vmatprep.subr.mxu0 0.0
    %1247 = vmatpush1.msra.mxu0 0.0
    %1248 = vmatprep.subr.mxu0 0.0
    %1249 = vmatpush1.msra.mxu0 0.0
    %1250 = vmatprep.subr.mxu0 0.0
    %1251 = vmatpush1.msra.mxu0 0.0
    %1252 = vmatprep.subr.mxu0 0.0
    %1253 = vmatpush1.msra.mxu0 0.0
    %1254 = vmatprep.subr.mxu0 0.0
    %1255 = vmatpush1.msra.mxu0 0.0
    %1256 = vmatprep.subr.mxu0 0.0
    %1257 = vmatpush1.msra.mxu0 0.0
    %1258 = vmatprep.subr.mxu0 0.0
    %1259 = vmatpush1.msra.mxu0 0.0
    %1260 = vmatprep.subr.mxu0 0.0
    %1261 = vmatpush1.msra.mxu0 0.0
    %1262 = vmatprep.subr.mxu0 0.0
    %1263 = vmatpush1.msra.mxu0 %v1049
    %1264 = vmatprep.subr.mxu0 0.0
    %1265 = vmatpush1.msra.mxu0 %v1048
    %1266 = vmatprep.subr.mxu0 0.0
    %1267 = vmatpush1.msra.mxu0 %v1047
    %1268 = vmatprep.subr.mxu0 0.0
    %1269 = vmatpush1.msra.mxu0 %v1046
    %1270 = vmatprep.subr.mxu0 0.0
    %1271 = vmatpush2.msra.mxu0 0.0
    %1272 = vmatprep.subr.mxu0 0.0
    %1273 = vmatpush2.msra.mxu0 0.0
    %1274 = vmatprep.subr.mxu0 0.0
    %1275 = vmatpush2.msra.mxu0 0.0
    %1276 = vmatprep.subr.mxu0 0.0
    %1277 = vmatpush2.msra.mxu0 0.0
    %1278 = vmatprep.subr.mxu0 0.0
    %1279 = vmatpush2.msra.mxu0 0.0
    %1280 = vmatprep.subr.mxu0 0.0
    %1281 = vmatpush2.msra.mxu0 0.0
    %1282 = vmatprep.subr.mxu0 0.0
    %1283 = vmatpush2.msra.mxu0 0.0
    %1284 = vmatprep.subr.mxu0 0.0
    %1285 = vmatpush2.msra.mxu0 0.0
    %1286 = vmatprep.subr.mxu0 0.0
    %1287 = vmatpush2.msra.mxu0 0.0
    %1288 = vmatprep.subr.mxu0 0.0
    %1289 = vmatpush2.msra.mxu0 0.0
    %1290 = vmatprep.subr.mxu0 0.0
    %1291 = vmatpush2.msra.mxu0 0.0
    %1292 = vmatprep.subr.mxu0 0.0
    %1293 = vmatpush2.msra.mxu0 0.0
    %1294 = vmatprep.subr.mxu0 0.0
    %1295 = vmatpush2.msra.mxu0 0.0
    %1296 = vmatprep.subr.mxu0 0.0
    %1297 = vmatpush2.msra.mxu0 0.0
    %1298 = vmatprep.subr.mxu0 0.0
    %1299 = vmatpush2.msra.mxu0 0.0
    %1300 = vmatprep.subr.mxu0 0.0
    %1301 = vmatpush2.msra.mxu0 0.0
    %1302 = vmatprep.mubr.f32.mxu0 0.0
    %1303 = vmatmul.mubr.f32.gmra.mxu0 %v1236
    %v1304 = vpop.f32.mrf.mxu0
    %v1305 = vadd.f32 0.0, %v1304
    %v1306 = vpop.f32.mrf.mxu0
    %1307 = vdwg.mxu0
    %v1309 = vrot.slane %v1305, 6
    %v1311 = vadd.f32 %v1132, %v1309
    %v1312 = vmul.f32 %v1311, 0.5
    %v1313 = vtanh.pop %v1312
    %v1314 = vadd.f32 %v1313, 1.0
    %v1315 = vmul.f32 %v1314, 0.5
    %v1316 = vtanh.pop %v1311
    %v1318 = vrot.slane %v1226, 6
    %v1320 = vmul.f32 %v1315, %v1318
    %1322 = vrot.lane.b32.xlu0 %v1316, 64
    %v1323 = vpop.permute.xlu0 %1322
    %v1325 = vmul.f32 %v1315, %v1323
    %1327 = vrot.lane.b32.xlu0 %v1325, 32
    %v1328 = vpop.permute.xlu0 %1327
    %v1330 = vadd.f32 %v1320, %v1328
    %v1331 = vtanh.pop %v1330
    %1333 = vrot.lane.b32.xlu0 %v1331, 64
    %v1334 = vpop.permute.xlu0 %1333
    %v1336 = vmul.f32 %v1315, %v1334
    %v1338 = vrot.slane %v1336, 2
    %1339 = vrot.lane.b32.xlu0 %v1338, 32
    %v1340 = vpop.permute.xlu0 %1339
    %v1341 = vsel %vm182, %v1340, 0
    %1343 = vmatprep.subr.mxu0 0.0
    %1344 = vmatpush1.msra.mxu0 0.0
    %1345 = vmatprep.subr.mxu0 0.0
    %1346 = vmatpush1.msra.mxu0 0.0
    %1347 = vmatprep.subr.mxu0 0.0
    %1348 = vmatpush1.msra.mxu0 0.0
    %1349 = vmatprep.subr.mxu0 0.0
    %1350 = vmatpush1.msra.mxu0 0.0
    %1351 = vmatprep.subr.mxu0 0.0
    %1352 = vmatpush1.msra.mxu0 0.0
    %1353 = vmatprep.subr.mxu0 0.0
    %1354 = vmatpush1.msra.mxu0 0.0
    %1355 = vmatprep.subr.mxu0 0.0
    %1356 = vmatpush1.msra.mxu0 0.0
    %1357 = vmatprep.subr.mxu0 0.0
    %1358 = vmatpush1.msra.mxu0 0.0
    %1359 = vmatprep.subr.mxu0 0.0
    %1360 = vmatpush1.msra.mxu0 0.0
    %1361 = vmatprep.subr.mxu0 0.0
    %1362 = vmatpush1.msra.mxu0 0.0
    %1363 = vmatprep.subr.mxu0 0.0
    %1364 = vmatpush1.msra.mxu0 0.0
    %1365 = vmatprep.subr.mxu0 0.0
    %1366 = vmatpush1.msra.mxu0 0.0
    %1367 = vmatprep.subr.mxu0 0.0
    %1368 = vmatpush1.msra.mxu0 %v1049
    %1369 = vmatprep.subr.mxu0 0.0
    %1370 = vmatpush1.msra.mxu0 %v1048
    %1371 = vmatprep.subr.mxu0 0.0
    %1372 = vmatpush1.msra.mxu0 %v1047
    %1373 = vmatprep.subr.mxu0 0.0
    %1374 = vmatpush1.msra.mxu0 %v1046
    %1375 = vmatprep.subr.mxu0 0.0
    %1376 = vmatpush2.msra.mxu0 0.0
    %1377 = vmatprep.subr.mxu0 0.0
    %1378 = vmatpush2.msra.mxu0 0.0
    %1379 = vmatprep.subr.mxu0 0.0
    %1380 = vmatpush2.msra.mxu0 0.0
    %1381 = vmatprep.subr.mxu0 0.0
    %1382 = vmatpush2.msra.mxu0 0.0
    %1383 = vmatprep.subr.mxu0 0.0
    %1384 = vmatpush2.msra.mxu0 0.0
    %1385 = vmatprep.subr.mxu0 0.0
    %1386 = vmatpush2.msra.mxu0 0.0
    %1387 = vmatprep.subr.mxu0 0.0
    %1388 = vmatpush2.msra.mxu0 0.0
    %1389 = vmatprep.subr.mxu0 0.0
    %1390 = vmatpush2.msra.mxu0 0.0
    %1391 = vmatprep.subr.mxu0 0.0
    %1392 = vmatpush2.msra.mxu0 0.0
    %1393 = vmatprep.subr.mxu0 0.0
    %1394 = vmatpush2.msra.mxu0 0.0
    %1395 = vmatprep.subr.mxu0 0.0
    %1396 = vmatpush2.msra.mxu0 0.0
    %1397 = vmatprep.subr.mxu0 0.0
    %1398 = vmatpush2.msra.mxu0 0.0
    %1399 = vmatprep.subr.mxu0 0.0
    %1400 = vmatpush2.msra.mxu0 0.0
    %1401 = vmatprep.subr.mxu0 0.0
    %1402 = vmatpush2.msra.mxu0 0.0
    %1403 = vmatprep.subr.mxu0 0.0
    %1404 = vmatpush2.msra.mxu0 0.0
    %1405 = vmatprep.subr.mxu0 0.0
    %1406 = vmatpush2.msra.mxu0 0.0
    %1407 = vmatprep.mubr.f32.mxu0 0.0
    %1408 = vmatmul.mubr.f32.gmra.mxu0 %v1341
    %v1409 = vpop.f32.mrf.mxu0
    %v1410 = vadd.f32 0.0, %v1409
    %v1411 = vpop.f32.mrf.mxu0
    %1412 = vdwg.mxu0
    %v1414 = vrot.slane %v1410, 4
    %v1416 = vadd.f32 %v1132, %v1414
    %v1417 = vmul.f32 %v1416, 0.5
    %v1418 = vtanh.pop %v1417
    %v1419 = vadd.f32 %v1418, 1.0
    %v1420 = vmul.f32 %v1419, 0.5
    %v1421 = vtanh.pop %v1416
    %v1423 = vrot.slane %v1330, 6
    %v1425 = vmul.f32 %v1420, %v1423
    %1427 = vrot.lane.b32.xlu0 %v1421, 64
    %v1428 = vpop.permute.xlu0 %1427
    %v1430 = vmul.f32 %v1420, %v1428
    %1432 = vrot.lane.b32.xlu0 %v1430, 32
    %v1433 = vpop.permute.xlu0 %1432
    %v1435 = vadd.f32 %v1425, %v1433
    %v1436 = vtanh.pop %v1435
    %1438 = vrot.lane.b32.xlu0 %v1436, 64
    %v1439 = vpop.permute.xlu0 %1438
    %v1441 = vmul.f32 %v1420, %v1439
    %v1443 = vrot.slane %v1441, 4
    %1444 = vrot.lane.b32.xlu0 %v1443, 32
    %v1445 = vpop.permute.xlu0 %1444
    %v1446 = vsel %vm182, %v1445, 0
    %1448 = vmatprep.subr.mxu0 0.0
    %1449 = vmatpush1.msra.mxu0 0.0
    %1450 = vmatprep.subr.mxu0 0.0
    %1451 = vmatpush1.msra.mxu0 0.0
    %1452 = vmatprep.subr.mxu0 0.0
    %1453 = vmatpush1.msra.mxu0 0.0
    %1454 = vmatprep.subr.mxu0 0.0
    %1455 = vmatpush1.msra.mxu0 0.0
    %1456 = vmatprep.subr.mxu0 0.0
    %1457 = vmatpush1.msra.mxu0 0.0
    %1458 = vmatprep.subr.mxu0 0.0
    %1459 = vmatpush1.msra.mxu0 0.0
    %1460 = vmatprep.subr.mxu0 0.0
    %1461 = vmatpush1.msra.mxu0 0.0
    %1462 = vmatprep.subr.mxu0 0.0
    %1463 = vmatpush1.msra.mxu0 0.0
    %1464 = vmatprep.subr.mxu0 0.0
    %1465 = vmatpush1.msra.mxu0 0.0
    %1466 = vmatprep.subr.mxu0 0.0
    %1467 = vmatpush1.msra.mxu0 0.0
    %1468 = vmatprep.subr.mxu0 0.0
    %1469 = vmatpush1.msra.mxu0 0.0
    %1470 = vmatprep.subr.mxu0 0.0
    %1471 = vmatpush1.msra.mxu0 0.0
    %1472 = vmatprep.subr.mxu0 0.0
    %1473 = vmatpush1.msra.mxu0 %v1049
    %1474 = vmatprep.subr.mxu0 0.0
    %1475 = vmatpush1.msra.mxu0 %v1048
    %1476 = vmatprep.subr.mxu0 0.0
    %1477 = vmatpush1.msra.mxu0 %v1047
    %1478 = vmatprep.subr.mxu0 0.0
    %1479 = vmatpush1.msra.mxu0 %v1046
    %1480 = vmatprep.subr.mxu0 0.0
    %1481 = vmatpush2.msra.mxu0 0.0
    %1482 = vmatprep.subr.mxu0 0.0
    %1483 = vmatpush2.msra.mxu0 0.0
    %1484 = vmatprep.subr.mxu0 0.0
    %1485 = vmatpush2.msra.mxu0 0.0
    %1486 = vmatprep.subr.mxu0 0.0
    %1487 = vmatpush2.msra.mxu0 0.0
    %1488 = vmatprep.subr.mxu0 0.0
    %1489 = vmatpush2.msra.mxu0 0.0
    %1490 = vmatprep.subr.mxu0 0.0
    %1491 = vmatpush2.msra.mxu0 0.0
    %1492 = vmatprep.subr.mxu0 0.0
    %1493 = vmatpush2.msra.mxu0 0.0
    %1494 = vmatprep.subr.mxu0 0.0
    %1495 = vmatpush2.msra.mxu0 0.0
    %1496 = vmatprep.subr.mxu0 0.0
    %1497 = vmatpush2.msra.mxu0 0.0
    %1498 = vmatprep.subr.mxu0 0.0
    %1499 = vmatpush2.msra.mxu0 0.0
    %1500 = vmatprep.subr.mxu0 0.0
    %1501 = vmatpush2.msra.mxu0 0.0
    %1502 = vmatprep.subr.mxu0 0.0
    %1503 = vmatpush2.msra.mxu0 0.0
    %1504 = vmatprep.subr.mxu0 0.0
    %1505 = vmatpush2.msra.mxu0 0.0
    %1506 = vmatprep.subr.mxu0 0.0
    %1507 = vmatpush2.msra.mxu0 0.0
    %1508 = vmatprep.subr.mxu0 0.0
    %1509 = vmatpush2.msra.mxu0 0.0
    %1510 = vmatprep.subr.mxu0 0.0
    %1511 = vmatpush2.msra.mxu0 0.0
    %1512 = vmatprep.mubr.f32.mxu0 0.0
    %1513 = vmatmul.mubr.f32.gmra.mxu0 %v1446
    %v1514 = vpop.f32.mrf.mxu0
    %v1515 = vadd.f32 0.0, %v1514
    %v1516 = vpop.f32.mrf.mxu0
    %1517 = vdwg.mxu0
    %v1519 = vrot.slane %v1515, 2
    %v1521 = vadd.f32 %v1132, %v1519
    %v1522 = vmul.f32 %v1521, 0.5
    %v1523 = vtanh.pop %v1522
    %v1524 = vadd.f32 %v1523, 1.0
    %v1525 = vmul.f32 %v1524, 0.5
    %v1526 = vtanh.pop %v1521
    %v1528 = vrot.slane %v1435, 6
    %v1530 = vmul.f32 %v1525, %v1528
    %1532 = vrot.lane.b32.xlu0 %v1526, 64
    %v1533 = vpop.permute.xlu0 %1532
    %v1535 = vmul.f32 %v1525, %v1533
    %1537 = vrot.lane.b32.xlu0 %v1535, 32
    %v1538 = vpop.permute.xlu0 %1537
    %v1540 = vadd.f32 %v1530, %v1538
    %v1541 = vtanh.pop %v1540
    %1543 = vrot.lane.b32.xlu0 %v1541, 64
    %v1544 = vpop.permute.xlu0 %1543
    %v1546 = vmul.f32 %v1525, %v1544
    %v1548 = vrot.slane %v1546, 6
    %1549 = vrot.lane.b32.xlu0 %v1548, 32
    %v1550 = vpop.permute.xlu0 %1549
    %v1551 = vsel %vm182, %v1550, 0
    %1553 = vmatprep.subr.mxu0 0.0
    %1554 = vmatpush1.msra.mxu0 0.0
    %1555 = vmatprep.subr.mxu0 0.0
    %1556 = vmatpush1.msra.mxu0 0.0
    %1557 = vmatprep.subr.mxu0 0.0
    %1558 = vmatpush1.msra.mxu0 0.0
    %1559 = vmatprep.subr.mxu0 0.0
    %1560 = vmatpush1.msra.mxu0 0.0
    %1561 = vmatprep.subr.mxu0 0.0
    %1562 = vmatpush1.msra.mxu0 0.0
    %1563 = vmatprep.subr.mxu0 0.0
    %1564 = vmatpush1.msra.mxu0 0.0
    %1565 = vmatprep.subr.mxu0 0.0
    %1566 = vmatpush1.msra.mxu0 0.0
    %1567 = vmatprep.subr.mxu0 0.0
    %1568 = vmatpush1.msra.mxu0 0.0
    %1569 = vmatprep.subr.mxu0 0.0
    %1570 = vmatpush1.msra.mxu0 0.0
    %1571 = vmatprep.subr.mxu0 0.0
    %1572 = vmatpush1.msra.mxu0 0.0
    %1573 = vmatprep.subr.mxu0 0.0
    %1574 = vmatpush1.msra.mxu0 0.0
    %1575 = vmatprep.subr.mxu0 0.0
    %1576 = vmatpush1.msra.mxu0 0.0
    %1577 = vmatprep.subr.mxu0 0.0
    %1578 = vmatpush1.msra.mxu0 %v1049
    %1579 = vmatprep.subr.mxu0 0.0
    %1580 = vmatpush1.msra.mxu0 %v1048
    %1581 = vmatprep.subr.mxu0 0.0
    %1582 = vmatpush1.msra.mxu0 %v1047
    %1583 = vmatprep.subr.mxu0 0.0
    %1584 = vmatpush1.msra.mxu0 %v1046
    %1585 = vmatprep.subr.mxu0 0.0
    %1586 = vmatpush2.msra.mxu0 0.0
    %1587 = vmatprep.subr.mxu0 0.0
    %1588 = vmatpush2.msra.mxu0 0.0
    %1589 = vmatprep.subr.mxu0 0.0
    %1590 = vmatpush2.msra.mxu0 0.0
    %1591 = vmatprep.subr.mxu0 0.0
    %1592 = vmatpush2.msra.mxu0 0.0
    %1593 = vmatprep.subr.mxu0 0.0
    %1594 = vmatpush2.msra.mxu0 0.0
    %1595 = vmatprep.subr.mxu0 0.0
    %1596 = vmatpush2.msra.mxu0 0.0
    %1597 = vmatprep.subr.mxu0 0.0
    %1598 = vmatpush2.msra.mxu0 0.0
    %1599 = vmatprep.subr.mxu0 0.0
    %1600 = vmatpush2.msra.mxu0 0.0
    %1601 = vmatprep.subr.mxu0 0.0
    %1602 = vmatpush2.msra.mxu0 0.0
    %1603 = vmatprep.subr.mxu0 0.0
    %1604 = vmatpush2.msra.mxu0 0.0
    %1605 = vmatprep.subr.mxu0 0.0
    %1606 = vmatpush2.msra.mxu0 0.0
    %1607 = vmatprep.subr.mxu0 0.0
    %1608 = vmatpush2.msra.mxu0 0.0
    %1609 = vmatprep.subr.mxu0 0.0
    %1610 = vmatpush2.msra.mxu0 0.0
    %1611 = vmatprep.subr.mxu0 0.0
    %1612 = vmatpush2.msra.mxu0 0.0
    %1613 = vmatprep.subr.mxu0 0.0
    %1614 = vmatpush2.msra.mxu0 0.0
    %1615 = vmatprep.subr.mxu0 0.0
    %1616 = vmatpush2.msra.mxu0 0.0
    %1617 = vmatprep.mubr.f32.mxu0 0.0
    %1618 = vmatmul.mubr.f32.gmra.mxu0 %v1551
    %v1619 = vpop.f32.mrf.mxu0
    %v1620 = vadd.f32 0.0, %v1619
    %v1621 = vpop.f32.mrf.mxu0
    %1622 = vdwg.mxu0
    %v1623 = vadd.f32 %v1137, %v1620
    %v1624 = vmul.f32 %v1623, 0.5
    %v1625 = vtanh.pop %v1624
    %v1626 = vadd.f32 %v1625, 1.0
    %v1627 = vmul.f32 %v1626, 0.5
    %v1628 = vtanh.pop %v1623
    %v1630 = vrot.slane %v1540, 6
    %v1632 = vmul.f32 %v1627, %v1630
    %1634 = vrot.lane.b32.xlu0 %v1628, 64
    %v1635 = vpop.permute.xlu0 %1634
    %v1637 = vmul.f32 %v1627, %v1635
    %1639 = vrot.lane.b32.xlu0 %v1637, 32
    %v1640 = vpop.permute.xlu0 %1639
    %v1642 = vadd.f32 %v1632, %v1640
    %v1643 = vtanh.pop %v1642
    %1645 = vrot.lane.b32.xlu0 %v1643, 64
    %v1646 = vpop.permute.xlu0 %1645
    %v1648 = vmul.f32 %v1627, %v1646
    %1650 = vrot.lane.b32.xlu0 %v1648, 32
    %v1651 = vpop.permute.xlu0 %1650
    %v1652 = vsel %vm182, %v1651, 0
    %1654 = vmatprep.subr.mxu0 0.0
    %1655 = vmatpush1.msra.mxu0 0.0
    %1656 = vmatprep.subr.mxu0 0.0
    %1657 = vmatpush1.msra.mxu0 0.0
    %1658 = vmatprep.subr.mxu0 0.0
    %1659 = vmatpush1.msra.mxu0 0.0
    %1660 = vmatprep.subr.mxu0 0.0
    %1661 = vmatpush1.msra.mxu0 0.0
    %1662 = vmatprep.subr.mxu0 0.0
    %1663 = vmatpush1.msra.mxu0 0.0
    %1664 = vmatprep.subr.mxu0 0.0
    %1665 = vmatpush1.msra.mxu0 0.0
    %1666 = vmatprep.subr.mxu0 0.0
    %1667 = vmatpush1.msra.mxu0 0.0
    %1668 = vmatprep.subr.mxu0 0.0
    %1669 = vmatpush1.msra.mxu0 0.0
    %1670 = vmatprep.subr.mxu0 0.0
    %1671 = vmatpush1.msra.mxu0 0.0
    %1672 = vmatprep.subr.mxu0 0.0
    %1673 = vmatpush1.msra.mxu0 0.0
    %1674 = vmatprep.subr.mxu0 0.0
    %1675 = vmatpush1.msra.mxu0 0.0
    %1676 = vmatprep.subr.mxu0 0.0
    %1677 = vmatpush1.msra.mxu0 0.0
    %1678 = vmatprep.subr.mxu0 0.0
    %1679 = vmatpush1.msra.mxu0 %v1049
    %1680 = vmatprep.subr.mxu0 0.0
    %1681 = vmatpush1.msra.mxu0 %v1048
    %1682 = vmatprep.subr.mxu0 0.0
    %1683 = vmatpush1.msra.mxu0 %v1047
    %1684 = vmatprep.subr.mxu0 0.0
    %1685 = vmatpush1.msra.mxu0 %v1046
    %1686 = vmatprep.subr.mxu0 0.0
    %1687 = vmatpush2.msra.mxu0 0.0
    %1688 = vmatprep.subr.mxu0 0.0
    %1689 = vmatpush2.msra.mxu0 0.0
    %1690 = vmatprep.subr.mxu0 0.0
    %1691 = vmatpush2.msra.mxu0 0.0
    %1692 = vmatprep.subr.mxu0 0.0
    %1693 = vmatpush2.msra.mxu0 0.0
    %1694 = vmatprep.subr.mxu0 0.0
    %1695 = vmatpush2.msra.mxu0 0.0
    %1696 = vmatprep.subr.mxu0 0.0
    %1697 = vmatpush2.msra.mxu0 0.0
    %1698 = vmatprep.subr.mxu0 0.0
    %1699 = vmatpush2.msra.mxu0 0.0
    %1700 = vmatprep.subr.mxu0 0.0
    %1701 = vmatpush2.msra.mxu0 0.0
    %1702 = vmatprep.subr.mxu0 0.0
    %1703 = vmatpush2.msra.mxu0 0.0
    %1704 = vmatprep.subr.mxu0 0.0
    %1705 = vmatpush2.msra.mxu0 0.0
    %1706 = vmatprep.subr.mxu0 0.0
    %1707 = vmatpush2.msra.mxu0 0.0
    %1708 = vmatprep.subr.mxu0 0.0
    %1709 = vmatpush2.msra.mxu0 0.0
    %1710 = vmatprep.subr.mxu0 0.0
    %1711 = vmatpush2.msra.mxu0 0.0
    %1712 = vmatprep.subr.mxu0 0.0
    %1713 = vmatpush2.msra.mxu0 0.0
    %1714 = vmatprep.subr.mxu0 0.0
    %1715 = vmatpush2.msra.mxu0 0.0
    %1716 = vmatprep.subr.mxu0 0.0
    %1717 = vmatpush2.msra.mxu0 0.0
    %1718 = vmatprep.mubr.f32.mxu0 0.0
    %1719 = vmatmul.mubr.f32.gmra.mxu0 %v1652
    %v1720 = vpop.f32.mrf.mxu0
    %v1721 = vadd.f32 0.0, %v1720
    %v1722 = vpop.f32.mrf.mxu0
    %1723 = vdwg.mxu0
    %v1725 = vrot.slane %v1721, 6
    %v1727 = vadd.f32 %v1137, %v1725
    %v1728 = vmul.f32 %v1727, 0.5
    %v1729 = vtanh.pop %v1728
    %v1730 = vadd.f32 %v1729, 1.0
    %v1731 = vmul.f32 %v1730, 0.5
    %v1732 = vtanh.pop %v1727
    %v1734 = vrot.slane %v1642, 6
    %v1736 = vmul.f32 %v1731, %v1734
    %1738 = vrot.lane.b32.xlu0 %v1732, 64
    %v1739 = vpop.permute.xlu0 %1738
    %v1741 = vmul.f32 %v1731, %v1739
    %1743 = vrot.lane.b32.xlu0 %v1741, 32
    %v1744 = vpop.permute.xlu0 %1743
    %v1746 = vadd.f32 %v1736, %v1744
    %v1747 = vtanh.pop %v1746
    %1749 = vrot.lane.b32.xlu0 %v1747, 64
    %v1750 = vpop.permute.xlu0 %1749
    %v1752 = vmul.f32 %v1731, %v1750
    %v1754 = vrot.slane %v1752, 2
    %1755 = vrot.lane.b32.xlu0 %v1754, 32
    %v1756 = vpop.permute.xlu0 %1755
    %v1757 = vsel %vm182, %v1756, 0
    %1759 = vmatprep.subr.mxu0 0.0
    %1760 = vmatpush1.msra.mxu0 0.0
    %1761 = vmatprep.subr.mxu0 0.0
    %1762 = vmatpush1.msra.mxu0 0.0
    %1763 = vmatprep.subr.mxu0 0.0
    %1764 = vmatpush1.msra.mxu0 0.0
    %1765 = vmatprep.subr.mxu0 0.0
    %1766 = vmatpush1.msra.mxu0 0.0
    %1767 = vmatprep.subr.mxu0 0.0
    %1768 = vmatpush1.msra.mxu0 0.0
    %1769 = vmatprep.subr.mxu0 0.0
    %1770 = vmatpush1.msra.mxu0 0.0
    %1771 = vmatprep.subr.mxu0 0.0
    %1772 = vmatpush1.msra.mxu0 0.0
    %1773 = vmatprep.subr.mxu0 0.0
    %1774 = vmatpush1.msra.mxu0 0.0
    %1775 = vmatprep.subr.mxu0 0.0
    %1776 = vmatpush1.msra.mxu0 0.0
    %1777 = vmatprep.subr.mxu0 0.0
    %1778 = vmatpush1.msra.mxu0 0.0
    %1779 = vmatprep.subr.mxu0 0.0
    %1780 = vmatpush1.msra.mxu0 0.0
    %1781 = vmatprep.subr.mxu0 0.0
    %1782 = vmatpush1.msra.mxu0 0.0
    %1783 = vmatprep.subr.mxu0 0.0
    %1784 = vmatpush1.msra.mxu0 %v1049
    %1785 = vmatprep.subr.mxu0 0.0
    %1786 = vmatpush1.msra.mxu0 %v1048
    %1787 = vmatprep.subr.mxu0 0.0
    %1788 = vmatpush1.msra.mxu0 %v1047
    %1789 = vmatprep.subr.mxu0 0.0
    %1790 = vmatpush1.msra.mxu0 %v1046
    %1791 = vmatprep.subr.mxu0 0.0
    %1792 = vmatpush2.msra.mxu0 0.0
    %1793 = vmatprep.subr.mxu0 0.0
    %1794 = vmatpush2.msra.mxu0 0.0
    %1795 = vmatprep.subr.mxu0 0.0
    %1796 = vmatpush2.msra.mxu0 0.0
    %1797 = vmatprep.subr.mxu0 0.0
    %1798 = vmatpush2.msra.mxu0 0.0
    %1799 = vmatprep.subr.mxu0 0.0
    %1800 = vmatpush2.msra.mxu0 0.0
    %1801 = vmatprep.subr.mxu0 0.0
    %1802 = vmatpush2.msra.mxu0 0.0
    %1803 = vmatprep.subr.mxu0 0.0
    %1804 = vmatpush2.msra.mxu0 0.0
    %1805 = vmatprep.subr.mxu0 0.0
    %1806 = vmatpush2.msra.mxu0 0.0
    %1807 = vmatprep.subr.mxu0 0.0
    %1808 = vmatpush2.msra.mxu0 0.0
    %1809 = vmatprep.subr.mxu0 0.0
    %1810 = vmatpush2.msra.mxu0 0.0
    %1811 = vmatprep.subr.mxu0 0.0
    %1812 = vmatpush2.msra.mxu0 0.0
    %1813 = vmatprep.subr.mxu0 0.0
    %1814 = vmatpush2.msra.mxu0 0.0
    %1815 = vmatprep.subr.mxu0 0.0
    %1816 = vmatpush2.msra.mxu0 0.0
    %1817 = vmatprep.subr.mxu0 0.0
    %1818 = vmatpush2.msra.mxu0 0.0
    %1819 = vmatprep.subr.mxu0 0.0
    %1820 = vmatpush2.msra.mxu0 0.0
    %1821 = vmatprep.subr.mxu0 0.0
    %1822 = vmatpush2.msra.mxu0 0.0
    %1823 = vmatprep.mubr.f32.mxu0 0.0
    %1824 = vmatmul.mubr.f32.gmra.mxu0 %v1757
    %v1825 = vpop.f32.mrf.mxu0
    %v1826 = vadd.f32 0.0, %v1825
    %v1827 = vpop.f32.mrf.mxu0
    %1828 = vdwg.mxu0
    %v1830 = vrot.slane %v1826, 4
    %v1832 = vadd.f32 %v1137, %v1830
    %v1833 = vmul.f32 %v1832, 0.5
    %v1834 = vtanh.pop %v1833
    %v1835 = vadd.f32 %v1834, 1.0
    %v1836 = vmul.f32 %v1835, 0.5
    %v1837 = vtanh.pop %v1832
    %v1839 = vrot.slane %v1746, 6
    %v1841 = vmul.f32 %v1836, %v1839
    %1843 = vrot.lane.b32.xlu0 %v1837, 64
    %v1844 = vpop.permute.xlu0 %1843
    %v1846 = vmul.f32 %v1836, %v1844
    %1848 = vrot.lane.b32.xlu0 %v1846, 32
    %v1849 = vpop.permute.xlu0 %1848
    %v1851 = vadd.f32 %v1841, %v1849
    %v1852 = vtanh.pop %v1851
    %1854 = vrot.lane.b32.xlu0 %v1852, 64
    %v1855 = vpop.permute.xlu0 %1854
    %v1857 = vmul.f32 %v1836, %v1855
    %v1859 = vrot.slane %v1857, 4
    %1860 = vrot.lane.b32.xlu0 %v1859, 32
    %v1861 = vpop.permute.xlu0 %1860
    %v1862 = vsel %vm182, %v1861, 0
    %1864 = vmatprep.subr.mxu0 0.0
    %1865 = vmatpush1.msra.mxu0 0.0
    %1866 = vmatprep.subr.mxu0 0.0
    %1867 = vmatpush1.msra.mxu0 0.0
    %1868 = vmatprep.subr.mxu0 0.0
    %1869 = vmatpush1.msra.mxu0 0.0
    %1870 = vmatprep.subr.mxu0 0.0
    %1871 = vmatpush1.msra.mxu0 0.0
    %1872 = vmatprep.subr.mxu0 0.0
    %1873 = vmatpush1.msra.mxu0 0.0
    %1874 = vmatprep.subr.mxu0 0.0
    %1875 = vmatpush1.msra.mxu0 0.0
    %1876 = vmatprep.subr.mxu0 0.0
    %1877 = vmatpush1.msra.mxu0 0.0
    %1878 = vmatprep.subr.mxu0 0.0
    %1879 = vmatpush1.msra.mxu0 0.0
    %1880 = vmatprep.subr.mxu0 0.0
    %1881 = vmatpush1.msra.mxu0 0.0
    %1882 = vmatprep.subr.mxu0 0.0
    %1883 = vmatpush1.msra.mxu0 0.0
    %1884 = vmatprep.subr.mxu0 0.0
    %1885 = vmatpush1.msra.mxu0 0.0
    %1886 = vmatprep.subr.mxu0 0.0
    %1887 = vmatpush1.msra.mxu0 0.0
    %1888 = vmatprep.subr.mxu0 0.0
    %1889 = vmatpush1.msra.mxu0 %v1049
    %1890 = vmatprep.subr.mxu0 0.0
    %1891 = vmatpush1.msra.mxu0 %v1048
    %1892 = vmatprep.subr.mxu0 0.0
    %1893 = vmatpush1.msra.mxu0 %v1047
    %1894 = vmatprep.subr.mxu0 0.0
    %1895 = vmatpush1.msra.mxu0 %v1046
    %1896 = vmatprep.subr.mxu0 0.0
    %1897 = vmatpush2.msra.mxu0 0.0
    %1898 = vmatprep.subr.mxu0 0.0
    %1899 = vmatpush2.msra.mxu0 0.0
    %1900 = vmatprep.subr.mxu0 0.0
    %1901 = vmatpush2.msra.mxu0 0.0
    %1902 = vmatprep.subr.mxu0 0.0
    %1903 = vmatpush2.msra.mxu0 0.0
    %1904 = vmatprep.subr.mxu0 0.0
    %1905 = vmatpush2.msra.mxu0 0.0
    %1906 = vmatprep.subr.mxu0 0.0
    %1907 = vmatpush2.msra.mxu0 0.0
    %1908 = vmatprep.subr.mxu0 0.0
    %1909 = vmatpush2.msra.mxu0 0.0
    %1910 = vmatprep.subr.mxu0 0.0
    %1911 = vmatpush2.msra.mxu0 0.0
    %1912 = vmatprep.subr.mxu0 0.0
    %1913 = vmatpush2.msra.mxu0 0.0
    %1914 = vmatprep.subr.mxu0 0.0
    %1915 = vmatpush2.msra.mxu0 0.0
    %1916 = vmatprep.subr.mxu0 0.0
    %1917 = vmatpush2.msra.mxu0 0.0
    %1918 = vmatprep.subr.mxu0 0.0
    %1919 = vmatpush2.msra.mxu0 0.0
    %1920 = vmatprep.subr.mxu0 0.0
    %1921 = vmatpush2.msra.mxu0 0.0
    %1922 = vmatprep.subr.mxu0 0.0
    %1923 = vmatpush2.msra.mxu0 0.0
    %1924 = vmatprep.subr.mxu0 0.0
    %1925 = vmatpush2.msra.mxu0 0.0
    %1926 = vmatprep.subr.mxu0 0.0
    %1927 = vmatpush2.msra.mxu0 0.0
    %1928 = vmatprep.mubr.f32.mxu0 0.0
    %1929 = vmatmul.mubr.f32.gmra.mxu0 %v1862
    %v1930 = vpop.f32.mrf.mxu0
    %v1931 = vadd.f32 0.0, %v1930
    %v1932 = vpop.f32.mrf.mxu0
    %1933 = vdwg.mxu0
    %v1935 = vrot.slane %v1931, 2
    %v1937 = vadd.f32 %v1137, %v1935
    %v1938 = vmul.f32 %v1937, 0.5
    %v1939 = vtanh.pop %v1938
    %v1940 = vadd.f32 %v1939, 1.0
    %v1941 = vmul.f32 %v1940, 0.5
    %v1942 = vtanh.pop %v1937
    %v1944 = vrot.slane %v1851, 6
    %v1946 = vmul.f32 %v1941, %v1944
    %1948 = vrot.lane.b32.xlu0 %v1942, 64
    %v1949 = vpop.permute.xlu0 %1948
    %v1951 = vmul.f32 %v1941, %v1949
    %1953 = vrot.lane.b32.xlu0 %v1951, 32
    %v1954 = vpop.permute.xlu0 %1953
    %v1956 = vadd.f32 %v1946, %v1954
    %v1957 = vtanh.pop %v1956
    %1959 = vrot.lane.b32.xlu0 %v1957, 64
    %v1960 = vpop.permute.xlu0 %1959
    %v1962 = vmul.f32 %v1941, %v1960
    %v1963 = vld [vmem:[%s7] sm:$0xff]
    %v1964 = vld [vmem:[%s7 + $0x8] sm:$0xff]
    %v1965 = vld [vmem:[%s7 + $0x10] sm:$0xff]
    %v1966 = vld [vmem:[%s7 + $0x18] sm:$0xff]
    %v1967 = vld [vmem:[%s8] sm:$0x1]
    %v1969 = vlaneseq
    %v1970 = vshrl.u32 %v1969, 7
    %v1971 = vsub.s32 0, %v1970
    %v1972 = vrot.slane %v1967, %v1971
    %v1975 = vrot.slane %v1962, 6
    %1976 = vrot.lane.b32.xlu0 %v1975, 32
    %v1977 = vpop.permute.xlu0 %1976
    %v1978 = vsel %vm182, %v1977, 0
    %1980 = vmatprep.subr.mxu0 0.0
    %1981 = vmatpush1.msra.mxu0 0.0
    %1982 = vmatprep.subr.mxu0 0.0
    %1983 = vmatpush1.msra.mxu0 0.0
    %1984 = vmatprep.subr.mxu0 0.0
    %1985 = vmatpush1.msra.mxu0 0.0
    %1986 = vmatprep.subr.mxu0 0.0
    %1987 = vmatpush1.msra.mxu0 0.0
    %1988 = vmatprep.subr.mxu0 0.0
    %1989 = vmatpush1.msra.mxu0 0.0
    %1990 = vmatprep.subr.mxu0 0.0
    %1991 = vmatpush1.msra.mxu0 0.0
    %1992 = vmatprep.subr.mxu0 0.0
    %1993 = vmatpush1.msra.mxu0 0.0
    %1994 = vmatprep.subr.mxu0 0.0
    %1995 = vmatpush1.msra.mxu0 0.0
    %1996 = vmatprep.subr.mxu0 0.0
    %1997 = vmatpush1.msra.mxu0 0.0
    %1998 = vmatprep.subr.mxu0 0.0
    %1999 = vmatpush1.msra.mxu0 0.0
    %2000 = vmatprep.subr.mxu0 0.0
    %2001 = vmatpush1.msra.mxu0 0.0
    %2002 = vmatprep.subr.mxu0 0.0
    %2003 = vmatpush1.msra.mxu0 0.0
    %2004 = vmatprep.subr.mxu0 0.0
    %2005 = vmatpush1.msra.mxu0 %v1966
    %2006 = vmatprep.subr.mxu0 0.0
    %2007 = vmatpush1.msra.mxu0 %v1965
    %2008 = vmatprep.subr.mxu0 0.0
    %2009 = vmatpush1.msra.mxu0 %v1964
    %2010 = vmatprep.subr.mxu0 0.0
    %2011 = vmatpush1.msra.mxu0 %v1963
    %2012 = vmatprep.subr.mxu0 0.0
    %2013 = vmatpush2.msra.mxu0 0.0
    %2014 = vmatprep.subr.mxu0 0.0
    %2015 = vmatpush2.msra.mxu0 0.0
    %2016 = vmatprep.subr.mxu0 0.0
    %2017 = vmatpush2.msra.mxu0 0.0
    %2018 = vmatprep.subr.mxu0 0.0
    %2019 = vmatpush2.msra.mxu0 0.0
    %2020 = vmatprep.subr.mxu0 0.0
    %2021 = vmatpush2.msra.mxu0 0.0
    %2022 = vmatprep.subr.mxu0 0.0
    %2023 = vmatpush2.msra.mxu0 0.0
    %2024 = vmatprep.subr.mxu0 0.0
    %2025 = vmatpush2.msra.mxu0 0.0
    %2026 = vmatprep.subr.mxu0 0.0
    %2027 = vmatpush2.msra.mxu0 0.0
    %2028 = vmatprep.subr.mxu0 0.0
    %2029 = vmatpush2.msra.mxu0 0.0
    %2030 = vmatprep.subr.mxu0 0.0
    %2031 = vmatpush2.msra.mxu0 0.0
    %2032 = vmatprep.subr.mxu0 0.0
    %2033 = vmatpush2.msra.mxu0 0.0
    %2034 = vmatprep.subr.mxu0 0.0
    %2035 = vmatpush2.msra.mxu0 0.0
    %2036 = vmatprep.subr.mxu0 0.0
    %2037 = vmatpush2.msra.mxu0 0.0
    %2038 = vmatprep.subr.mxu0 0.0
    %2039 = vmatpush2.msra.mxu0 0.0
    %2040 = vmatprep.subr.mxu0 0.0
    %2041 = vmatpush2.msra.mxu0 0.0
    %2042 = vmatprep.subr.mxu0 0.0
    %2043 = vmatpush2.msra.mxu0 0.0
    %2044 = vmatprep.mubr.f32.mxu0 0.0
    %2045 = vmatmul.mubr.f32.gmra.mxu0 %v1978
    %v2046 = vpop.f32.mrf.mxu0
    %v2047 = vadd.f32 %v1972, %v2046
    %v2048 = vpop.f32.mrf.mxu0
    %2049 = vdwg.mxu0
    %vm2050 = vcmask 25600
    %2051 = vst.msk [vmem:[#allocation11] sm:$0x3] %vm2050, %v2047
    // Predicated region
    $region54: #{tpu_custom_call.1} parent=1 // pred_check
      _
    $region55: #{tpu_custom_call.1} parent=1 // pred_check_branch
      %2053 = sbr.rel (0) target = $region57
    $region56: #{tpu_custom_call.1} parent=1 // pred_region
      %s2055 = ssub.s32 32, 32
      %2056 = vsyncadd [#allocation5], %s2055
      %s2058 = sshll.u32 [#allocation11], 4
      %s2059 = int_to_ptr.vmem [resolvable:$true] %s2058
      %2061 = dma.vmem_to_hbm [thread:$0]  %s2059, 32, %s9, [#allocation5]
    $region57: #{tpu_custom_call.1} parent=1 // pred_fallthru
      _
    // Predicated region
    $region58: #{tpu_custom_call.1} parent=1 // pred_check
      _
    $region59: #{tpu_custom_call.1} parent=1 // pred_check_branch
      %2063 = sbr.rel (0) target = $region61
    $region60: #{tpu_custom_call.1} parent=1 // pred_region
      %2064 = dma.done [#allocation5], 32
    $region61: #{tpu_custom_call.1} parent=1 // pred_fallthru
      _
    %2065 = vsyncpa [#allocation4], 1
    %2066 = vsyncpa [#allocation7], 1
    %2067 = vsyncpa [#allocation10], 1
    %2068 = vsyncpa [#allocation5], 1

</llo_original>
